<compile_context>
chip_gen: v7x
topology: tpu7x:2x2x1
jax: 0.10.0
libtpu: 0.0.40
codegen_flags: <defaults>
</compile_context>

<pallas_src>
import functools

import jax
import jax.numpy as jnp
from jax.experimental import pallas as pl
from jax.experimental.pallas import tpu as pltpu


def rnn_kernel(x_ref, wih0_ref, whh0_ref, b0_ref,
               wih_r_ref, whh_r_ref, br_ref,
               wfc_ref, bfc_ref,
               out_ref, h_scratch, act_scratch, *, num_layers, block_t):
    """One grid step = `block_t` timesteps, processed layer-major.

    x_ref holds a (block_t * B, I) time-major slab (row t*B + b).
    h_scratch carries the per-layer hidden state across grid steps.
    act_scratch stages the current layer's outputs (input of the next layer).
    """
    s = pl.program_id(0)

    # Zero all per-layer hidden states at the first block.
    @pl.when(s == 0)
    def _():
        h_scratch[...] = jnp.zeros_like(h_scratch)

    B = h_scratch.shape[1]
    hdt = h_scratch.dtype
    top = num_layers - 1

    # ---------------- Layer 0 ----------------
    # One batched MXU matmul for the input projection of all block_t steps.
    proj = (jnp.dot(x_ref[...], wih0_ref[...],
                    preferred_element_type=jnp.float32)
            + b0_ref[...])                                  # (tb*B, H) f32
    whh = whh0_ref[...]                                     # (H, H)  bf16
    h = h_scratch[0]                                        # (B, H)  bf16
    for t in range(block_t):
        a = proj[t * B:(t + 1) * B, :] + jnp.dot(
            h, whh, preferred_element_type=jnp.float32)
        h = jnp.tanh(a).astype(hdt)
        if top > 0:
            act_scratch[t * B:(t + 1) * B, :] = h           # feeds layer 1
    h_scratch[0] = h

    # ---------------- Layers 1 .. L-1 ----------------
    for l in range(top):
        # Batched input projection over the whole block (reads the previous
        # layer's staged activations before they are overwritten below).
        proj = (jnp.dot(act_scratch[...], wih_r_ref[l],
                        preferred_element_type=jnp.float32)
                + br_ref[l])                                # (tb*B, H) f32
        whh = whh_r_ref[l]
        h = h_scratch[l + 1]
        for t in range(block_t):
            a = proj[t * B:(t + 1) * B, :] + jnp.dot(
                h, whh, preferred_element_type=jnp.float32)
            h = jnp.tanh(a).astype(hdt)
            if l + 1 < top:
                act_scratch[t * B:(t + 1) * B, :] = h
        h_scratch[l + 1] = h

    # Last block: FC head on the top layer's final h (== rnn_out[:, -1, :]).
    @pl.when(s == pl.num_programs(0) - 1)
    def _():
        out_ref[...] = (
            jnp.dot(h, wfc_ref[...], preferred_element_type=jnp.float32)
            + bfc_ref[...]).astype(out_ref.dtype)


def _pick_time_block(T, B, cap=128):
    """Largest timestep block <= cap such that the block is layout-legal."""
    if T <= cap:
        return T                       # single/whole block == full extent
    for d in range(cap, 0, -1):
        if T % d == 0 and (d * B) % 8 == 0:
            return d
    return T                           # fallback: one block covers everything


def simple_rnn_forward(x, params, *, num_layers, time_block_cap=128):
    """x: (B, T, I) batch-first (PyTorch convention). Returns (B, O) float32."""
    B, T, I = x.shape
    H = params["whh0"].shape[0]
    O = params["wfc"].shape[1]
    Lr_blk = params["wih_r"].shape[0]          # >= 1 (dummy zeros if L == 1)

    tb = _pick_time_block(T, B, time_block_cap)
    grid = (T // tb,)

    # Time-major flattened x (row = t*B + b), bf16.  One XLA copy of x in
    # exchange for strictly 2-D dots + contiguous static slices in-kernel.
    x2 = jnp.transpose(x, (1, 0, 2)).reshape(T * B, I).astype(jnp.bfloat16)

    kernel = functools.partial(rnn_kernel, num_layers=num_layers, block_t=tb)

    # Weights/biases: constant index map -> single-buffered (no 2x VMEM).
    def const_spec(shape):
        nd = len(shape)
        return pl.BlockSpec(shape, lambda s, _n=nd: (0,) * _n,
                            pipeline_mode=pl.Buffered(1))

    grid_spec = pltpu.PrefetchScalarGridSpec(
        num_scalar_prefetch=0,
        grid=grid,
        in_specs=[
            pl.BlockSpec((tb * B, I), lambda s: (s, 0)),     # x block (time-major)
            const_spec((I, H)),                              # Wih layer 0
            const_spec((H, H)),                              # Whh layer 0
            const_spec((1, H)),                              # bias layer 0
            const_spec((Lr_blk, H, H)),                      # Wih layers >= 1
            const_spec((Lr_blk, H, H)),                      # Whh layers >= 1
            const_spec((Lr_blk, 1, H)),                      # bias layers >= 1
            const_spec((H, O)),                              # fc weight
            const_spec((1, O)),                              # fc bias
        ],
        out_specs=pl.BlockSpec((B, O), lambda s: (0, 0)),
        scratch_shapes=[
            pltpu.VMEM((num_layers, B, H), jnp.bfloat16),    # carried h per layer
            pltpu.VMEM((tb * B, H), jnp.bfloat16),           # layer->layer acts
        ],
    )

    return pl.pallas_call(
        kernel,
        out_shape=jax.ShapeDtypeStruct((B, O), jnp.float32),
        grid_spec=grid_spec,
        compiler_params=pltpu.CompilerParams(
            dimension_semantics=("arbitrary",)),  # sequential recurrence
    )(x2, params["wih0"], params["whh0"], params["b0"],
      params["wih_r"], params["whh_r"], params["br"],
      params["wfc"], params["bfc"])


def init_params(key, input_size, hidden_size, output_size, num_layers):
    """Deterministic init mimicking PyTorch's U(-1/sqrt(H), 1/sqrt(H)).

    Weights stored transposed (row-major x @ W) and in bfloat16 (MXU native);
    biases stay float32 and are added to the f32 accumulator.
    """
    k = 1.0 / jnp.sqrt(hidden_size)
    keys = jax.random.split(key, 8)
    u = lambda kk, shape, s: jax.random.uniform(kk, shape, jnp.float32, -s, s)
    Lr = num_layers - 1
    Lr_blk = max(Lr, 1)

    wih_r = u(keys[4], (Lr_blk, hidden_size, hidden_size), k)
    whh_r = u(keys[5], (Lr_blk, hidden_size, hidden_size), k)
    br = (u(keys[6], (Lr_blk, 1, hidden_size), k)
          + u(keys[7], (Lr_blk, 1, hidden_size), k))
    if Lr == 0:  # dummy (never read by the kernel)
        wih_r = jnp.zeros_like(wih_r)
        whh_r = jnp.zeros_like(whh_r)
        br = jnp.zeros_like(br)

    bf = jnp.bfloat16
    return {
        "wih0": u(keys[0], (input_size, hidden_size), k).astype(bf),
        "whh0": u(keys[1], (hidden_size, hidden_size), k).astype(bf),
        "b0":   (u(keys[2], (1, hidden_size), k)
                 + u(keys[3], (1, hidden_size), k)),
        "wih_r": wih_r.astype(bf),
        "whh_r": whh_r.astype(bf),
        "br":    br,
        "wfc": u(jax.random.fold_in(key, 100),
                 (hidden_size, output_size), k).astype(bf),
        "bfc": u(jax.random.fold_in(key, 101),
                 (1, output_size), k),
    }


def rnn_reference(x, params, num_layers):
    """Pure-JAX reference (nn.RNN tanh + Linear on last step), mirroring the
    kernel's bf16 quantization points so the comparison is tight."""
    B, T, _ = x.shape
    H = params["whh0"].shape[0]
    f32 = lambda a: a.astype(jnp.float32)
    q = lambda a: a.astype(jnp.bfloat16).astype(jnp.float32)

    xq = q(x)
    h = [jnp.zeros((B, H), jnp.float32) for _ in range(num_layers)]
    inp = None
    for t in range(T):
        inp = xq[:, t, :]
        a0 = (inp @ f32(params["wih0"]) + h[0] @ f32(params["whh0"])
              + params["b0"])
        h[0] = q(jnp.tanh(a0))
        inp = h[0]
        for l in range(num_layers - 1):
            a = (inp @ f32(params["wih_r"][l]) + h[l + 1] @ f32(params["whh_r"][l])
                 + params["br"][l])
            h[l + 1] = q(jnp.tanh(a))
            inp = h[l + 1]
    return inp @ f32(params["wfc"]) + params["bfc"]


if __name__ == "__main__":
    # Small shapes implied by the forward: (batch, seq, input_size)
    B, T = 2, 8
    input_size, hidden_size, output_size, num_layers = 16, 32, 8, 2

    key = jax.random.PRNGKey(0)
    k_x, k_p = jax.random.split(key)
    x = jax.random.normal(k_x, (B, T, input_size), jnp.float32)
    params = init_params(k_p, input_size, hidden_size, output_size, num_layers)

    out = simple_rnn_forward(x, params, num_layers=num_layers)
    out = jax.block_until_ready(out)

    ref = rnn_reference(x, params, num_layers)
    assert out.shape == (B, output_size)
    assert jnp.allclose(out, ref, atol=2e-2, rtol=2e-2), "mismatch vs reference"

    print("KERNEL_OK")
</pallas_src>

<mosaic_0001>
module attributes {stable_mosaic.version = 11 : i64} {
  func.func @rnn_kernel(%arg0: i32, %arg1: memref<16x16xbf16, #tpu.memory_space<vmem>>, %arg2: memref<16x32xbf16, #tpu.memory_space<vmem>>, %arg3: memref<32x32xbf16, #tpu.memory_space<vmem>>, %arg4: memref<1x32xf32, #tpu.memory_space<vmem>>, %arg5: memref<1x32x32xbf16, #tpu.memory_space<vmem>>, %arg6: memref<1x32x32xbf16, #tpu.memory_space<vmem>>, %arg7: memref<1x1x32xf32, #tpu.memory_space<vmem>>, %arg8: memref<32x8xbf16, #tpu.memory_space<vmem>>, %arg9: memref<1x8xf32, #tpu.memory_space<vmem>>, %arg10: memref<2x8xf32, #tpu.memory_space<vmem>>, %arg11: memref<2x2x32xbf16, #tpu.memory_space<vmem>>, %arg12: memref<16x32xbf16, #tpu.memory_space<vmem>>) attributes {dimension_semantics = [#tpu.dimension_semantics<arbitrary>], iteration_bounds = array<i64: 1>, scalar_prefetch = 0 : i64, scratch_operands = 2 : i64, tpu.core_type = #tpu.core_type<tc>, window_params = [{transform_indices = @transform_0, window_bounds = array<i64: 16, 16>}, {pipeline_mode = #tpu.pipeline_mode<synchronous>, transform_indices = @transform_1, window_bounds = array<i64: 16, 32>}, {pipeline_mode = #tpu.pipeline_mode<synchronous>, transform_indices = @transform_2, window_bounds = array<i64: 32, 32>}, {pipeline_mode = #tpu.pipeline_mode<synchronous>, transform_indices = @transform_3, window_bounds = array<i64: 1, 32>}, {pipeline_mode = #tpu.pipeline_mode<synchronous>, transform_indices = @transform_4, window_bounds = array<i64: 1, 32, 32>}, {pipeline_mode = #tpu.pipeline_mode<synchronous>, transform_indices = @transform_5, window_bounds = array<i64: 1, 32, 32>}, {pipeline_mode = #tpu.pipeline_mode<synchronous>, transform_indices = @transform_6, window_bounds = array<i64: 1, 1, 32>}, {pipeline_mode = #tpu.pipeline_mode<synchronous>, transform_indices = @transform_7, window_bounds = array<i64: 32, 8>}, {pipeline_mode = #tpu.pipeline_mode<synchronous>, transform_indices = @transform_8, window_bounds = array<i64: 1, 8>}, {pipeline_mode = #tpu.pipeline_mode<synchronous>, transform_indices = @transform_9, window_bounds = array<i64: 2, 8>}]} {
    %c0_i32 = arith.constant 0 : i32
    %0 = arith.cmpi eq, %arg0, %c0_i32 : i32
    %1 = arith.extui %0 : i1 to i32
    %c0_i32_0 = arith.constant 0 : i32
    %2 = arith.cmpi ne, %1, %c0_i32_0 : i32
    scf.if %2 {
      %cst_58 = arith.constant 0.000000e+00 : bf16
      %121 = vector.broadcast %cst_58 : bf16 to vector<2x2x32xbf16>
      %c0_59 = arith.constant 0 : index
      %c0_60 = arith.constant 0 : index
      %c0_61 = arith.constant 0 : index
      %122 = vector.load %arg11[%c0_59, %c0_60, %c0_61] : memref<2x2x32xbf16, #tpu.memory_space<vmem>>, vector<2x2x32xbf16>
      tpu.vector_store %arg11[%c0_59, %c0_60, %c0_61], %121 {strides = array<i32>} : memref<2x2x32xbf16, #tpu.memory_space<vmem>>, vector<2x2x32xbf16>,
    } else {
    }
    %c0 = arith.constant 0 : index
    %c0_1 = arith.constant 0 : index
    %3 = vector.load %arg1[%c0, %c0_1] : memref<16x16xbf16, #tpu.memory_space<vmem>>, vector<16x16xbf16>
    %c0_2 = arith.constant 0 : index
    %c0_3 = arith.constant 0 : index
    %4 = vector.load %arg2[%c0_2, %c0_3] : memref<16x32xbf16, #tpu.memory_space<vmem>>, vector<16x32xbf16>
    %cst = arith.constant dense<0.000000e+00> : vector<16x32xf32>
    %5 = tpu.matmul %3, %4, %cst {dimension_numbers = #tpu.dot_dimension_numbers<[1], [0], [0], [1], [0, 0, 1, 1], [], []>} : vector<16x16xbf16>, vector<16x32xbf16>, vector<16x32xf32> -> vector<16x32xf32>
    %c0_4 = arith.constant 0 : index
    %c0_5 = arith.constant 0 : index
    %6 = vector.load %arg4[%c0_4, %c0_5] : memref<1x32xf32, #tpu.memory_space<vmem>>, vector<1x32xf32>
    %7 = vector.broadcast %6 : vector<1x32xf32> to vector<16x32xf32>
    %8 = arith.addf %5, %7 : vector<16x32xf32>
    %c0_6 = arith.constant 0 : index
    %c0_7 = arith.constant 0 : index
    %9 = vector.load %arg3[%c0_6, %c0_7] : memref<32x32xbf16, #tpu.memory_space<vmem>>, vector<32x32xbf16>
    %c0_8 = arith.constant 0 : index
    %c0_9 = arith.constant 0 : index
    %c0_10 = arith.constant 0 : index
    %10 = vector.load %arg11[%c0_8, %c0_9, %c0_10] : memref<2x2x32xbf16, #tpu.memory_space<vmem>>, vector<1x2x32xbf16>
    %11 = vector.shape_cast %10 : vector<1x2x32xbf16> to vector<2x32xbf16>
    %12 = vector.extract_strided_slice %8 {offsets = [0, 0], sizes = [2, 32], strides = [1, 1]} : vector<16x32xf32> to vector<2x32xf32>
    %cst_11 = arith.constant dense<0.000000e+00> : vector<2x32xf32>
    %13 = tpu.matmul %11, %9, %cst_11 {dimension_numbers = #tpu.dot_dimension_numbers<[1], [0], [0], [1], [0, 0, 1, 1], [], []>} : vector<2x32xbf16>, vector<32x32xbf16>, vector<2x32xf32> -> vector<2x32xf32>
    %14 = arith.addf %12, %13 : vector<2x32xf32>
    %15 = math.tanh %14 : vector<2x32xf32>
    %16 = arith.truncf %15 : vector<2x32xf32> to vector<2x32xbf16>
    %c0_12 = arith.constant 0 : index
    %c0_13 = arith.constant 0 : index
    %17 = vector.load %arg12[%c0_12, %c0_13] : memref<16x32xbf16, #tpu.memory_space<vmem>>, vector<2x32xbf16>
    tpu.vector_store %arg12[%c0_12, %c0_13], %16 {strides = array<i32>} : memref<16x32xbf16, #tpu.memory_space<vmem>>, vector<2x32xbf16>,
    %18 = vector.extract_strided_slice %8 {offsets = [2, 0], sizes = [2, 32], strides = [1, 1]} : vector<16x32xf32> to vector<2x32xf32>
    %cst_14 = arith.constant dense<0.000000e+00> : vector<2x32xf32>
    %19 = tpu.matmul %16, %9, %cst_14 {dimension_numbers = #tpu.dot_dimension_numbers<[1], [0], [0], [1], [0, 0, 1, 1], [], []>} : vector<2x32xbf16>, vector<32x32xbf16>, vector<2x32xf32> -> vector<2x32xf32>
    %20 = arith.addf %18, %19 : vector<2x32xf32>
    %21 = math.tanh %20 : vector<2x32xf32>
    %22 = arith.truncf %21 : vector<2x32xf32> to vector<2x32xbf16>
    %c2 = arith.constant 2 : index
    %c0_15 = arith.constant 0 : index
    %23 = vector.load %arg12[%c2, %c0_15] : memref<16x32xbf16, #tpu.memory_space<vmem>>, vector<2x32xbf16>
    tpu.vector_store %arg12[%c2, %c0_15], %22 {strides = array<i32>} : memref<16x32xbf16, #tpu.memory_space<vmem>>, vector<2x32xbf16>,
    %24 = vector.extract_strided_slice %8 {offsets = [4, 0], sizes = [2, 32], strides = [1, 1]} : vector<16x32xf32> to vector<2x32xf32>
    %cst_16 = arith.constant dense<0.000000e+00> : vector<2x32xf32>
    %25 = tpu.matmul %22, %9, %cst_16 {dimension_numbers = #tpu.dot_dimension_numbers<[1], [0], [0], [1], [0, 0, 1, 1], [], []>} : vector<2x32xbf16>, vector<32x32xbf16>, vector<2x32xf32> -> vector<2x32xf32>
    %26 = arith.addf %24, %25 : vector<2x32xf32>
    %27 = math.tanh %26 : vector<2x32xf32>
    %28 = arith.truncf %27 : vector<2x32xf32> to vector<2x32xbf16>
    %c4 = arith.constant 4 : index
    %c0_17 = arith.constant 0 : index
    %29 = vector.load %arg12[%c4, %c0_17] : memref<16x32xbf16, #tpu.memory_space<vmem>>, vector<2x32xbf16>
    tpu.vector_store %arg12[%c4, %c0_17], %28 {strides = array<i32>} : memref<16x32xbf16, #tpu.memory_space<vmem>>, vector<2x32xbf16>,
    %30 = vector.extract_strided_slice %8 {offsets = [6, 0], sizes = [2, 32], strides = [1, 1]} : vector<16x32xf32> to vector<2x32xf32>
    %cst_18 = arith.constant dense<0.000000e+00> : vector<2x32xf32>
    %31 = tpu.matmul %28, %9, %cst_18 {dimension_numbers = #tpu.dot_dimension_numbers<[1], [0], [0], [1], [0, 0, 1, 1], [], []>} : vector<2x32xbf16>, vector<32x32xbf16>, vector<2x32xf32> -> vector<2x32xf32>
    %32 = arith.addf %30, %31 : vector<2x32xf32>
    %33 = math.tanh %32 : vector<2x32xf32>
    %34 = arith.truncf %33 : vector<2x32xf32> to vector<2x32xbf16>
    %c6 = arith.constant 6 : index
    %c0_19 = arith.constant 0 : index
    %35 = vector.load %arg12[%c6, %c0_19] : memref<16x32xbf16, #tpu.memory_space<vmem>>, vector<2x32xbf16>
    tpu.vector_store %arg12[%c6, %c0_19], %34 {strides = array<i32>} : memref<16x32xbf16, #tpu.memory_space<vmem>>, vector<2x32xbf16>,
    %36 = vector.extract_strided_slice %8 {offsets = [8, 0], sizes = [2, 32], strides = [1, 1]} : vector<16x32xf32> to vector<2x32xf32>
    %cst_20 = arith.constant dense<0.000000e+00> : vector<2x32xf32>
    %37 = tpu.matmul %34, %9, %cst_20 {dimension_numbers = #tpu.dot_dimension_numbers<[1], [0], [0], [1], [0, 0, 1, 1], [], []>} : vector<2x32xbf16>, vector<32x32xbf16>, vector<2x32xf32> -> vector<2x32xf32>
    %38 = arith.addf %36, %37 : vector<2x32xf32>
    %39 = math.tanh %38 : vector<2x32xf32>
    %40 = arith.truncf %39 : vector<2x32xf32> to vector<2x32xbf16>
    %c8 = arith.constant 8 : index
    %c0_21 = arith.constant 0 : index
    %41 = vector.load %arg12[%c8, %c0_21] : memref<16x32xbf16, #tpu.memory_space<vmem>>, vector<2x32xbf16>
    tpu.vector_store %arg12[%c8, %c0_21], %40 {strides = array<i32>} : memref<16x32xbf16, #tpu.memory_space<vmem>>, vector<2x32xbf16>,
    %42 = vector.extract_strided_slice %8 {offsets = [10, 0], sizes = [2, 32], strides = [1, 1]} : vector<16x32xf32> to vector<2x32xf32>
    %cst_22 = arith.constant dense<0.000000e+00> : vector<2x32xf32>
    %43 = tpu.matmul %40, %9, %cst_22 {dimension_numbers = #tpu.dot_dimension_numbers<[1], [0], [0], [1], [0, 0, 1, 1], [], []>} : vector<2x32xbf16>, vector<32x32xbf16>, vector<2x32xf32> -> vector<2x32xf32>
    %44 = arith.addf %42, %43 : vector<2x32xf32>
    %45 = math.tanh %44 : vector<2x32xf32>
    %46 = arith.truncf %45 : vector<2x32xf32> to vector<2x32xbf16>
    %c10 = arith.constant 10 : index
    %c0_23 = arith.constant 0 : index
    %47 = vector.load %arg12[%c10, %c0_23] : memref<16x32xbf16, #tpu.memory_space<vmem>>, vector<2x32xbf16>
    tpu.vector_store %arg12[%c10, %c0_23], %46 {strides = array<i32>} : memref<16x32xbf16, #tpu.memory_space<vmem>>, vector<2x32xbf16>,
    %48 = vector.extract_strided_slice %8 {offsets = [12, 0], sizes = [2, 32], strides = [1, 1]} : vector<16x32xf32> to vector<2x32xf32>
    %cst_24 = arith.constant dense<0.000000e+00> : vector<2x32xf32>
    %49 = tpu.matmul %46, %9, %cst_24 {dimension_numbers = #tpu.dot_dimension_numbers<[1], [0], [0], [1], [0, 0, 1, 1], [], []>} : vector<2x32xbf16>, vector<32x32xbf16>, vector<2x32xf32> -> vector<2x32xf32>
    %50 = arith.addf %48, %49 : vector<2x32xf32>
    %51 = math.tanh %50 : vector<2x32xf32>
    %52 = arith.truncf %51 : vector<2x32xf32> to vector<2x32xbf16>
    %c12 = arith.constant 12 : index
    %c0_25 = arith.constant 0 : index
    %53 = vector.load %arg12[%c12, %c0_25] : memref<16x32xbf16, #tpu.memory_space<vmem>>, vector<2x32xbf16>
    tpu.vector_store %arg12[%c12, %c0_25], %52 {strides = array<i32>} : memref<16x32xbf16, #tpu.memory_space<vmem>>, vector<2x32xbf16>,
    %54 = vector.extract_strided_slice %8 {offsets = [14, 0], sizes = [2, 32], strides = [1, 1]} : vector<16x32xf32> to vector<2x32xf32>
    %cst_26 = arith.constant dense<0.000000e+00> : vector<2x32xf32>
    %55 = tpu.matmul %52, %9, %cst_26 {dimension_numbers = #tpu.dot_dimension_numbers<[1], [0], [0], [1], [0, 0, 1, 1], [], []>} : vector<2x32xbf16>, vector<32x32xbf16>, vector<2x32xf32> -> vector<2x32xf32>
    %56 = arith.addf %54, %55 : vector<2x32xf32>
    %57 = math.tanh %56 : vector<2x32xf32>
    %58 = arith.truncf %57 : vector<2x32xf32> to vector<2x32xbf16>
    %c14 = arith.constant 14 : index
    %c0_27 = arith.constant 0 : index
    %59 = vector.load %arg12[%c14, %c0_27] : memref<16x32xbf16, #tpu.memory_space<vmem>>, vector<2x32xbf16>
    tpu.vector_store %arg12[%c14, %c0_27], %58 {strides = array<i32>} : memref<16x32xbf16, #tpu.memory_space<vmem>>, vector<2x32xbf16>,
    %c0_28 = arith.constant 0 : index
    %c0_29 = arith.constant 0 : index
    %c0_30 = arith.constant 0 : index
    %60 = vector.load %arg11[%c0_28, %c0_29, %c0_30] : memref<2x2x32xbf16, #tpu.memory_space<vmem>>, vector<1x2x32xbf16>
    %61 = vector.shape_cast %60 : vector<1x2x32xbf16> to vector<2x32xbf16>
    %62 = vector.shape_cast %58 : vector<2x32xbf16> to vector<1x2x32xbf16>
    tpu.vector_store %arg11[%c0_28, %c0_29, %c0_30], %62 {strides = array<i32>} : memref<2x2x32xbf16, #tpu.memory_space<vmem>>, vector<1x2x32xbf16>,
    %c0_31 = arith.constant 0 : index
    %c0_32 = arith.constant 0 : index
    %63 = vector.load %arg12[%c0_31, %c0_32] : memref<16x32xbf16, #tpu.memory_space<vmem>>, vector<16x32xbf16>
    %c0_33 = arith.constant 0 : index
    %c0_34 = arith.constant 0 : index
    %c0_35 = arith.constant 0 : index
    %64 = vector.load %arg5[%c0_33, %c0_34, %c0_35] : memref<1x32x32xbf16, #tpu.memory_space<vmem>>, vector<1x32x32xbf16>
    %65 = vector.shape_cast %64 : vector<1x32x32xbf16> to vector<32x32xbf16>
    %cst_36 = arith.constant dense<0.000000e+00> : vector<16x32xf32>
    %66 = tpu.matmul %63, %65, %cst_36 {dimension_numbers = #tpu.dot_dimension_numbers<[1], [0], [0], [1], [0, 0, 1, 1], [], []>} : vector<16x32xbf16>, vector<32x32xbf16>, vector<16x32xf32> -> vector<16x32xf32>
    %c0_37 = arith.constant 0 : index
    %c0_38 = arith.constant 0 : index
    %c0_39 = arith.constant 0 : index
    %67 = vector.load %arg7[%c0_37, %c0_38, %c0_39] : memref<1x1x32xf32, #tpu.memory_space<vmem>>, vector<1x1x32xf32>
    %68 = vector.shape_cast %67 : vector<1x1x32xf32> to vector<1x32xf32>
    %69 = vector.broadcast %68 : vector<1x32xf32> to vector<16x32xf32>
    %70 = arith.addf %66, %69 : vector<16x32xf32>
    %c0_40 = arith.constant 0 : index
    %c0_41 = arith.constant 0 : index
    %c0_42 = arith.constant 0 : index
    %71 = vector.load %arg6[%c0_40, %c0_41, %c0_42] : memref<1x32x32xbf16, #tpu.memory_space<vmem>>, vector<1x32x32xbf16>
    %72 = vector.shape_cast %71 : vector<1x32x32xbf16> to vector<32x32xbf16>
    %c1 = arith.constant 1 : index
    %c0_43 = arith.constant 0 : index
    %c0_44 = arith.constant 0 : index
    %73 = vector.load %arg11[%c1, %c0_43, %c0_44] : memref<2x2x32xbf16, #tpu.memory_space<vmem>>, vector<1x2x32xbf16>
    %74 = vector.shape_cast %73 : vector<1x2x32xbf16> to vector<2x32xbf16>
    %75 = vector.extract_strided_slice %70 {offsets = [0, 0], sizes = [2, 32], strides = [1, 1]} : vector<16x32xf32> to vector<2x32xf32>
    %cst_45 = arith.constant dense<0.000000e+00> : vector<2x32xf32>
    %76 = tpu.matmul %74, %72, %cst_45 {dimension_numbers = #tpu.dot_dimension_numbers<[1], [0], [0], [1], [0, 0, 1, 1], [], []>} : vector<2x32xbf16>, vector<32x32xbf16>, vector<2x32xf32> -> vector<2x32xf32>
    %77 = arith.addf %75, %76 : vector<2x32xf32>
    %78 = math.tanh %77 : vector<2x32xf32>
    %79 = arith.truncf %78 : vector<2x32xf32> to vector<2x32xbf16>
    %80 = vector.extract_strided_slice %70 {offsets = [2, 0], sizes = [2, 32], strides = [1, 1]} : vector<16x32xf32> to vector<2x32xf32>
    %cst_46 = arith.constant dense<0.000000e+00> : vector<2x32xf32>
    %81 = tpu.matmul %79, %72, %cst_46 {dimension_numbers = #tpu.dot_dimension_numbers<[1], [0], [0], [1], [0, 0, 1, 1], [], []>} : vector<2x32xbf16>, vector<32x32xbf16>, vector<2x32xf32> -> vector<2x32xf32>
    %82 = arith.addf %80, %81 : vector<2x32xf32>
    %83 = math.tanh %82 : vector<2x32xf32>
    %84 = arith.truncf %83 : vector<2x32xf32> to vector<2x32xbf16>
    %85 = vector.extract_strided_slice %70 {offsets = [4, 0], sizes = [2, 32], strides = [1, 1]} : vector<16x32xf32> to vector<2x32xf32>
    %cst_47 = arith.constant dense<0.000000e+00> : vector<2x32xf32>
    %86 = tpu.matmul %84, %72, %cst_47 {dimension_numbers = #tpu.dot_dimension_numbers<[1], [0], [0], [1], [0, 0, 1, 1], [], []>} : vector<2x32xbf16>, vector<32x32xbf16>, vector<2x32xf32> -> vector<2x32xf32>
    %87 = arith.addf %85, %86 : vector<2x32xf32>
    %88 = math.tanh %87 : vector<2x32xf32>
    %89 = arith.truncf %88 : vector<2x32xf32> to vector<2x32xbf16>
    %90 = vector.extract_strided_slice %70 {offsets = [6, 0], sizes = [2, 32], strides = [1, 1]} : vector<16x32xf32> to vector<2x32xf32>
    %cst_48 = arith.constant dense<0.000000e+00> : vector<2x32xf32>
    %91 = tpu.matmul %89, %72, %cst_48 {dimension_numbers = #tpu.dot_dimension_numbers<[1], [0], [0], [1], [0, 0, 1, 1], [], []>} : vector<2x32xbf16>, vector<32x32xbf16>, vector<2x32xf32> -> vector<2x32xf32>
    %92 = arith.addf %90, %91 : vector<2x32xf32>
    %93 = math.tanh %92 : vector<2x32xf32>
    %94 = arith.truncf %93 : vector<2x32xf32> to vector<2x32xbf16>
    %95 = vector.extract_strided_slice %70 {offsets = [8, 0], sizes = [2, 32], strides = [1, 1]} : vector<16x32xf32> to vector<2x32xf32>
    %cst_49 = arith.constant dense<0.000000e+00> : vector<2x32xf32>
    %96 = tpu.matmul %94, %72, %cst_49 {dimension_numbers = #tpu.dot_dimension_numbers<[1], [0], [0], [1], [0, 0, 1, 1], [], []>} : vector<2x32xbf16>, vector<32x32xbf16>, vector<2x32xf32> -> vector<2x32xf32>
    %97 = arith.addf %95, %96 : vector<2x32xf32>
    %98 = math.tanh %97 : vector<2x32xf32>
    %99 = arith.truncf %98 : vector<2x32xf32> to vector<2x32xbf16>
    %100 = vector.extract_strided_slice %70 {offsets = [10, 0], sizes = [2, 32], strides = [1, 1]} : vector<16x32xf32> to vector<2x32xf32>
    %cst_50 = arith.constant dense<0.000000e+00> : vector<2x32xf32>
    %101 = tpu.matmul %99, %72, %cst_50 {dimension_numbers = #tpu.dot_dimension_numbers<[1], [0], [0], [1], [0, 0, 1, 1], [], []>} : vector<2x32xbf16>, vector<32x32xbf16>, vector<2x32xf32> -> vector<2x32xf32>
    %102 = arith.addf %100, %101 : vector<2x32xf32>
    %103 = math.tanh %102 : vector<2x32xf32>
    %104 = arith.truncf %103 : vector<2x32xf32> to vector<2x32xbf16>
    %105 = vector.extract_strided_slice %70 {offsets = [12, 0], sizes = [2, 32], strides = [1, 1]} : vector<16x32xf32> to vector<2x32xf32>
    %cst_51 = arith.constant dense<0.000000e+00> : vector<2x32xf32>
    %106 = tpu.matmul %104, %72, %cst_51 {dimension_numbers = #tpu.dot_dimension_numbers<[1], [0], [0], [1], [0, 0, 1, 1], [], []>} : vector<2x32xbf16>, vector<32x32xbf16>, vector<2x32xf32> -> vector<2x32xf32>
    %107 = arith.addf %105, %106 : vector<2x32xf32>
    %108 = math.tanh %107 : vector<2x32xf32>
    %109 = arith.truncf %108 : vector<2x32xf32> to vector<2x32xbf16>
    %110 = vector.extract_strided_slice %70 {offsets = [14, 0], sizes = [2, 32], strides = [1, 1]} : vector<16x32xf32> to vector<2x32xf32>
    %cst_52 = arith.constant dense<0.000000e+00> : vector<2x32xf32>
    %111 = tpu.matmul %109, %72, %cst_52 {dimension_numbers = #tpu.dot_dimension_numbers<[1], [0], [0], [1], [0, 0, 1, 1], [], []>} : vector<2x32xbf16>, vector<32x32xbf16>, vector<2x32xf32> -> vector<2x32xf32>
    %112 = arith.addf %110, %111 : vector<2x32xf32>
    %113 = math.tanh %112 : vector<2x32xf32>
    %114 = arith.truncf %113 : vector<2x32xf32> to vector<2x32xbf16>
    %c1_53 = arith.constant 1 : index
    %c0_54 = arith.constant 0 : index
    %c0_55 = arith.constant 0 : index
    %115 = vector.load %arg11[%c1_53, %c0_54, %c0_55] : memref<2x2x32xbf16, #tpu.memory_space<vmem>>, vector<1x2x32xbf16>
    %116 = vector.shape_cast %115 : vector<1x2x32xbf16> to vector<2x32xbf16>
    %117 = vector.shape_cast %114 : vector<2x32xbf16> to vector<1x2x32xbf16>
    tpu.vector_store %arg11[%c1_53, %c0_54, %c0_55], %117 {strides = array<i32>} : memref<2x2x32xbf16, #tpu.memory_space<vmem>>, vector<1x2x32xbf16>,
    %c0_i32_56 = arith.constant 0 : i32
    %118 = arith.cmpi eq, %arg0, %c0_i32_56 : i32
    %119 = arith.extui %118 : i1 to i32
    %c0_i32_57 = arith.constant 0 : i32
    %120 = arith.cmpi ne, %119, %c0_i32_57 : i32
    scf.if %120 {
      %c0_58 = arith.constant 0 : index
      %c0_59 = arith.constant 0 : index
      %121 = vector.load %arg8[%c0_58, %c0_59] : memref<32x8xbf16, #tpu.memory_space<vmem>>, vector<32x8xbf16>
      %cst_60 = arith.constant dense<0.000000e+00> : vector<2x8xf32>
      %122 = tpu.matmul %114, %121, %cst_60 {dimension_numbers = #tpu.dot_dimension_numbers<[1], [0], [0], [1], [0, 0, 1, 1], [], []>} : vector<2x32xbf16>, vector<32x8xbf16>, vector<2x8xf32> -> vector<2x8xf32>
      %c0_61 = arith.constant 0 : index
      %c0_62 = arith.constant 0 : index
      %123 = vector.load %arg9[%c0_61, %c0_62] : memref<1x8xf32, #tpu.memory_space<vmem>>, vector<1x8xf32>
      %124 = vector.broadcast %123 : vector<1x8xf32> to vector<2x8xf32>
      %125 = arith.addf %122, %124 : vector<2x8xf32>
      %c0_63 = arith.constant 0 : index
      %c0_64 = arith.constant 0 : index
      %126 = vector.load %arg10[%c0_63, %c0_64] : memref<2x8xf32, #tpu.memory_space<vmem>>, vector<2x8xf32>
      tpu.vector_store %arg10[%c0_63, %c0_64], %125 {strides = array<i32>} : memref<2x8xf32, #tpu.memory_space<vmem>>, vector<2x8xf32>,
    } else {
    }
    return
  }
  func.func @transform_0(%arg0: i32) -> (i32, i32) {
    %c0_i32 = arith.constant 0 : i32
    %c0_i32_0 = arith.constant 0 : i32
    return %arg0, %c0_i32 : i32, i32
  }
  func.func @transform_1(%arg0: i32) -> (i32, i32) {
    %c0_i32 = arith.constant 0 : i32
    %c0_i32_0 = arith.constant 0 : i32
    %c0_i32_1 = arith.constant 0 : i32
    return %c0_i32, %c0_i32_0 : i32, i32
  }
  func.func @transform_2(%arg0: i32) -> (i32, i32) {
    %c0_i32 = arith.constant 0 : i32
    %c0_i32_0 = arith.constant 0 : i32
    %c0_i32_1 = arith.constant 0 : i32
    return %c0_i32, %c0_i32_0 : i32, i32
  }
  func.func @transform_3(%arg0: i32) -> (i32, i32) {
    %c0_i32 = arith.constant 0 : i32
    %c0_i32_0 = arith.constant 0 : i32
    %c0_i32_1 = arith.constant 0 : i32
    return %c0_i32, %c0_i32_0 : i32, i32
  }
  func.func @transform_4(%arg0: i32) -> (i32, i32, i32) {
    %c0_i32 = arith.constant 0 : i32
    %c0_i32_0 = arith.constant 0 : i32
    %c0_i32_1 = arith.constant 0 : i32
    %c0_i32_2 = arith.constant 0 : i32
    return %c0_i32, %c0_i32_0, %c0_i32_1 : i32, i32, i32
  }
  func.func @transform_5(%arg0: i32) -> (i32, i32, i32) {
    %c0_i32 = arith.constant 0 : i32
    %c0_i32_0 = arith.constant 0 : i32
    %c0_i32_1 = arith.constant 0 : i32
    %c0_i32_2 = arith.constant 0 : i32
    return %c0_i32, %c0_i32_0, %c0_i32_1 : i32, i32, i32
  }
  func.func @transform_6(%arg0: i32) -> (i32, i32, i32) {
    %c0_i32 = arith.constant 0 : i32
    %c0_i32_0 = arith.constant 0 : i32
    %c0_i32_1 = arith.constant 0 : i32
    %c0_i32_2 = arith.constant 0 : i32
    return %c0_i32, %c0_i32_0, %c0_i32_1 : i32, i32, i32
  }
  func.func @transform_7(%arg0: i32) -> (i32, i32) {
    %c0_i32 = arith.constant 0 : i32
    %c0_i32_0 = arith.constant 0 : i32
    %c0_i32_1 = arith.constant 0 : i32
    return %c0_i32, %c0_i32_0 : i32, i32
  }
  func.func @transform_8(%arg0: i32) -> (i32, i32) {
    %c0_i32 = arith.constant 0 : i32
    %c0_i32_0 = arith.constant 0 : i32
    %c0_i32_1 = arith.constant 0 : i32
    return %c0_i32, %c0_i32_0 : i32, i32
  }
  func.func @transform_9(%arg0: i32) -> (i32, i32) {
    %c0_i32 = arith.constant 0 : i32
    %c0_i32_0 = arith.constant 0 : i32
    %c0_i32_1 = arith.constant 0 : i32
    return %c0_i32, %c0_i32_0 : i32, i32
  }
}

</mosaic_0001>

<llo_original>
// kernel: tpu_custom_call.1
$region0: #{tpu_custom_call.1}
  #allocation0 [shape = 'u32[]', space=smem, size = 0x4, offset = 0x4, fixed_abs, tag = 'smem constant byte address 0x4 - core index']
  #allocation1 [shape = 'u32[144,128]{1,0:T(1,128)}', space=vmem, size = 0x12000, scoped, tag = 'internal scratch']
  #allocation2 [shape = 'bf16[2,2,32]{2,1,0:T(2,128)(2,1)}', space=vmem, size = 0x400, scoped, tag = 'scratch operand']
  #allocation3 [shape = 'bf16[16,32]{1,0:T(16,128)(2,1)}', space=vmem, size = 0x1000, scoped, tag = 'scratch operand']
  %s0 = inlined_call_operand.hbm [shape: bf16[16,16], index: 0, kind: input, shape index: {}]
  %s1 = inlined_call_operand.hbm [shape: bf16[16,32], index: 1, kind: input, shape index: {}]
  %s2 = inlined_call_operand.vmem [shape: bf16[32,32], index: 2, kind: input, shape index: {}]
  %s3 = inlined_call_operand.vmem [shape: f32[1,32], index: 3, kind: input, shape index: {}]
  %s4 = inlined_call_operand.vmem [shape: bf16[1,32,32], index: 4, kind: input, shape index: {}]
  %s5 = inlined_call_operand.hbm [shape: bf16[1,32,32], index: 5, kind: input, shape index: {}]
  %s6 = inlined_call_operand.vmem [shape: f32[1,1,32], index: 6, kind: input, shape index: {}]
  %s7 = inlined_call_operand.vmem [shape: bf16[32,8], index: 7, kind: input, shape index: {}]
  %s8 = inlined_call_operand.vmem [shape: f32[1,8], index: 8, kind: input, shape index: {}]
  %s9 = inlined_call_operand.hbm [shape: f32[2,8], index: 9, kind: output, shape index: {}]
  %s10 = sld [smem:[#allocation0]]
  $region66: #{tpu_custom_call.1} parent=0
    _
  %s12 = ssub.s32 1, %s10
  %s13 = scalar_select 0, %s12, %s10
  $region1: #{tpu_custom_call.1} parent=0
    #allocation4 [shape = 'u8[4096]{0}', space=vmem, size = 0x1000, scoped, tag = 'input window, operand 0, single buffered']
    #allocation5 [shape = 's32[1]{0}', space=sflag, size = 0x4, scoped, tag = 'scoped memory for tpu_custom_call.1']
    #allocation6 [shape = 's32[1]{0}', space=sflag, size = 0x4, scoped, tag = 'scoped memory for tpu_custom_call.1']
    #allocation7 [shape = 'u8[4096]{0}', space=vmem, size = 0x1000, scoped, tag = 'input window, operand 1, single buffered']
    #allocation8 [shape = 's32[1]{0}', space=sflag, size = 0x4, scoped, tag = 'scoped memory for tpu_custom_call.1']
    #allocation9 [shape = 'u8[8192]{0}', space=vmem, size = 0x2000, scoped, tag = 'input window, operand 5, single buffered']
    #allocation10 [shape = 'u8[1024]{0}', space=vmem, size = 0x400, scoped, tag = 'output window, operand 0, single buffered']
    %14 = vsyncpa [#allocation5], 0
    %15 = vsyncpa [#allocation8], 0
    %16 = vsyncpa [#allocation6], 0
    // Predicated region
    $region2: #{tpu_custom_call.1} parent=1 // pred_check
      _
    $region3: #{tpu_custom_call.1} parent=1 // pred_check_branch
      %18 = sbr.rel (0) target = $region5
    $region4: #{tpu_custom_call.1} parent=1 // pred_region
      %s20 = ssub.s32 128, 128
      %21 = vsyncadd [#allocation5], %s20
      %s22 = sshll.u32 [#allocation4], 4
      %s23 = int_to_ptr.vmem [resolvable:$true] %s22
      %28 = dma.hbm_to_vmem [thread:$0]  %s0, 128, %s23, [#allocation5], 64, 64, 4
    $region5: #{tpu_custom_call.1} parent=1 // pred_fallthru
      _
    // Predicated region
    $region6: #{tpu_custom_call.1} parent=1 // pred_check
      _
    $region7: #{tpu_custom_call.1} parent=1 // pred_check_branch
      %30 = sbr.rel (0) target = $region9
    $region8: #{tpu_custom_call.1} parent=1 // pred_region
      %s32 = ssub.s32 128, 128
      %33 = vsyncadd [#allocation8], %s32
      %s34 = sshll.u32 [#allocation7], 4
      %s35 = int_to_ptr.vmem [resolvable:$true] %s34
      %40 = dma.hbm_to_vmem [thread:$0]  %s1, 128, %s35, [#allocation8], 64, 64, 4
    $region9: #{tpu_custom_call.1} parent=1 // pred_fallthru
      _
    // Predicated region
    $region10: #{tpu_custom_call.1} parent=1 // pred_check
      _
    $region11: #{tpu_custom_call.1} parent=1 // pred_check_branch
      %42 = sbr.rel (0) target = $region13
    $region12: #{tpu_custom_call.1} parent=1 // pred_region
      _
    $region13: #{tpu_custom_call.1} parent=1 // pred_fallthru
      _
    // Predicated region
    $region14: #{tpu_custom_call.1} parent=1 // pred_check
      _
    $region15: #{tpu_custom_call.1} parent=1 // pred_check_branch
      %44 = sbr.rel (0) target = $region17
    $region16: #{tpu_custom_call.1} parent=1 // pred_region
      _
    $region17: #{tpu_custom_call.1} parent=1 // pred_fallthru
      _
    // Predicated region
    $region18: #{tpu_custom_call.1} parent=1 // pred_check
      _
    $region19: #{tpu_custom_call.1} parent=1 // pred_check_branch
      %46 = sbr.rel (0) target = $region21
    $region20: #{tpu_custom_call.1} parent=1 // pred_region
      _
    $region21: #{tpu_custom_call.1} parent=1 // pred_fallthru
      _
    // Predicated region
    $region22: #{tpu_custom_call.1} parent=1 // pred_check
      _
    $region23: #{tpu_custom_call.1} parent=1 // pred_check_branch
      %48 = sbr.rel (0) target = $region25
    $region24: #{tpu_custom_call.1} parent=1 // pred_region
      %s50 = ssub.s32 256, 256
      %51 = vsyncadd [#allocation8], %s50
      %s52 = sshll.u32 [#allocation9], 4
      %s53 = int_to_ptr.vmem [resolvable:$true] %s52
      %58 = dma.hbm_to_vmem [thread:$0]  %s5, 256, %s53, [#allocation8], 64, 64, 4
    $region25: #{tpu_custom_call.1} parent=1 // pred_fallthru
      _
    // Predicated region
    $region26: #{tpu_custom_call.1} parent=1 // pred_check
      _
    $region27: #{tpu_custom_call.1} parent=1 // pred_check_branch
      %60 = sbr.rel (0) target = $region29
    $region28: #{tpu_custom_call.1} parent=1 // pred_region
      _
    $region29: #{tpu_custom_call.1} parent=1 // pred_fallthru
      _
    // Predicated region
    $region30: #{tpu_custom_call.1} parent=1 // pred_check
      _
    $region31: #{tpu_custom_call.1} parent=1 // pred_check_branch
      %62 = sbr.rel (0) target = $region33
    $region32: #{tpu_custom_call.1} parent=1 // pred_region
      _
    $region33: #{tpu_custom_call.1} parent=1 // pred_fallthru
      _
    // Predicated region
    $region34: #{tpu_custom_call.1} parent=1 // pred_check
      _
    $region35: #{tpu_custom_call.1} parent=1 // pred_check_branch
      %64 = sbr.rel (0) target = $region37
    $region36: #{tpu_custom_call.1} parent=1 // pred_region
      _
    $region37: #{tpu_custom_call.1} parent=1 // pred_fallthru
      _
    // Predicated region
    $region38: #{tpu_custom_call.1} parent=1 // pred_check
      _
    $region39: #{tpu_custom_call.1} parent=1 // pred_check_branch
      %66 = sbr.rel (0) target = $region41
    $region40: #{tpu_custom_call.1} parent=1 // pred_region
      %67 = dma.done [#allocation5], 128
    $region41: #{tpu_custom_call.1} parent=1 // pred_fallthru
      _
    // Predicated region
    $region42: #{tpu_custom_call.1} parent=1 // pred_check
      _
    $region43: #{tpu_custom_call.1} parent=1 // pred_check_branch
      %69 = sbr.rel (0) target = $region45
    $region44: #{tpu_custom_call.1} parent=1 // pred_region
      %70 = dma.done [#allocation8], 128
    $region45: #{tpu_custom_call.1} parent=1 // pred_fallthru
      _
    // Predicated region
    $region46: #{tpu_custom_call.1} parent=1 // pred_check
      _
    $region47: #{tpu_custom_call.1} parent=1 // pred_check_branch
      %72 = sbr.rel (0) target = $region49
    $region48: #{tpu_custom_call.1} parent=1 // pred_region
      %73 = dma.done [#allocation8], 256
    $region49: #{tpu_custom_call.1} parent=1 // pred_fallthru
      _
    %p75 = scmp.eq.s32.totalorder 0, 0
    // Predicated region
    $region50: #{tpu_custom_call.1} parent=1 // pred_check
      %p76 = pneg %p75
    $region51: #{tpu_custom_call.1} parent=1 // pred_check_branch
      %78 = sbr.rel (%p76) target = $region53
    $region52: #{tpu_custom_call.1} parent=1 // pred_region
      %vm79 = vcmask 253952
      %80 = vst.msk [vmem:[#allocation2] sm:$0x1] %vm79, 0
      %81 = vst.msk [vmem:[#allocation2 + $0x1] sm:$0x1] %vm79, 0
    $region53: #{tpu_custom_call.1} parent=1 // pred_fallthru
      _
    %v82 = vld [vmem:[#allocation4] sm:$0xf]
    %v83 = vld [vmem:[#allocation4 + $0x4] sm:$0xf]
    %v84 = vld [vmem:[#allocation7] sm:$0xf]
    %v85 = vld [vmem:[#allocation7 + $0x4] sm:$0xf]
    %v86 = vld [vmem:[%s3] sm:$0x1]
    %v88 = vlaneseq
    %v89 = vshrl.u32 %v88, 7
    %v90 = vsub.s32 0, %v89
    %v91 = vrot.slane %v86, %v90
    %v95 = vunpack.c.l.b16 %v82
    %v96 = vunpack.c.l.b16 %v83
    %v97 = vpack.c.b16 %v96, %v95
    %v100 = vunpack.c.l.b16 %v84
    %v101 = vunpack.c.l.b16 %v85
    %v102 = vpack.c.b16 %v101, %v100
    %vm104 = vcmask 130048
    %v106 = vsel %vm104, %v97, 0
    %108 = vmatprep.subr.bf16.mxu0 0
    %109 = vmatpush1.bf16.msra.mxu0 %v102
    %110 = vmatprep.subr.bf16.mxu0 0
    %111 = vmatpush1.bf16.msra.mxu0 0
    %112 = vmatprep.subr.bf16.mxu0 0
    %113 = vmatpush1.bf16.msra.mxu0 0
    %114 = vmatprep.subr.bf16.mxu0 0
    %115 = vmatpush1.bf16.msra.mxu0 0
    %116 = vmatprep.subr.bf16.mxu0 0
    %117 = vmatpush1.bf16.msra.mxu0 0
    %118 = vmatprep.subr.bf16.mxu0 0
    %119 = vmatpush1.bf16.msra.mxu0 0
    %120 = vmatprep.subr.bf16.mxu0 0
    %121 = vmatpush1.bf16.msra.mxu0 0
    %122 = vmatprep.subr.bf16.mxu0 0
    %123 = vmatpush1.bf16.msra.mxu0 0
    %124 = vmatprep.subr.bf16.mxu0 0
    %125 = vmatpush1.bf16.msra.mxu0 0
    %126 = vmatprep.subr.bf16.mxu0 0
    %127 = vmatpush1.bf16.msra.mxu0 0
    %128 = vmatprep.subr.bf16.mxu0 0
    %129 = vmatpush1.bf16.msra.mxu0 0
    %130 = vmatprep.subr.bf16.mxu0 0
    %131 = vmatpush1.bf16.msra.mxu0 0
    %132 = vmatprep.subr.bf16.mxu0 0
    %133 = vmatpush1.bf16.msra.mxu0 0
    %134 = vmatprep.subr.bf16.mxu0 0
    %135 = vmatpush1.bf16.msra.mxu0 0
    %136 = vmatprep.subr.bf16.mxu0 0
    %137 = vmatpush1.bf16.msra.mxu0 0
    %138 = vmatprep.subr.bf16.mxu0 0
    %139 = vmatpush1.bf16.msra.mxu0 0
    %140 = vmatprep.mubr.bf16.mxu0 0
    %141 = vmatmul.mubr.bf16.gmra.mrb[0].mxu0 %v106
    %v142 = vpop.f32.mrb[0].mxu0
    %v143 = vadd.f32 %v91, %v142
    %v144 = vpop.f32.mrb[0].mxu0
    %v145 = vpop.f32.mrb[0].mxu0
    %v146 = vadd.f32 %v91, %v145
    %v147 = vpop.f32.mrb[0].mxu0
    %148 = vdwg.mxu0
    %v149 = vld [vmem:[%s2] sm:$0xf]
    %v150 = vld [vmem:[%s2 + $0x4] sm:$0xf]
    %v151 = vld [vmem:[%s2 + $0x8] sm:$0xf]
    %v152 = vld [vmem:[%s2 + $0xc] sm:$0xf]
    %v153 = vld [vmem:[#allocation2] sm:$0x1]
    %v158 = vunpack.c.l.b16 %v149
    %v159 = vunpack.c.l.b16 %v150
    %v160 = vunpack.c.l.b16 %v151
    %v161 = vunpack.c.l.b16 %v152
    %v162 = vpack.c.b16 %v159, %v158
    %v163 = vpack.c.b16 %v161, %v160
    %vm166 = vcmask 261120
    %v168 = vsel %vm166, %v153, 0
    %170 = vmatprep.subr.bf16.mxu0 0
    %171 = vmatpush1.bf16.msra.mxu0 %v162
    %172 = vmatprep.subr.bf16.mxu0 0
    %173 = vmatpush1.bf16.msra.mxu0 %v163
    %174 = vmatprep.subr.bf16.mxu0 0
    %175 = vmatpush1.bf16.msra.mxu0 0
    %176 = vmatprep.subr.bf16.mxu0 0
    %177 = vmatpush1.bf16.msra.mxu0 0
    %178 = vmatprep.subr.bf16.mxu0 0
    %179 = vmatpush1.bf16.msra.mxu0 0
    %180 = vmatprep.subr.bf16.mxu0 0
    %181 = vmatpush1.bf16.msra.mxu0 0
    %182 = vmatprep.subr.bf16.mxu0 0
    %183 = vmatpush1.bf16.msra.mxu0 0
    %184 = vmatprep.subr.bf16.mxu0 0
    %185 = vmatpush1.bf16.msra.mxu0 0
    %186 = vmatprep.subr.bf16.mxu0 0
    %187 = vmatpush1.bf16.msra.mxu0 0
    %188 = vmatprep.subr.bf16.mxu0 0
    %189 = vmatpush1.bf16.msra.mxu0 0
    %190 = vmatprep.subr.bf16.mxu0 0
    %191 = vmatpush1.bf16.msra.mxu0 0
    %192 = vmatprep.subr.bf16.mxu0 0
    %193 = vmatpush1.bf16.msra.mxu0 0
    %194 = vmatprep.subr.bf16.mxu0 0
    %195 = vmatpush1.bf16.msra.mxu0 0
    %196 = vmatprep.subr.bf16.mxu0 0
    %197 = vmatpush1.bf16.msra.mxu0 0
    %198 = vmatprep.subr.bf16.mxu0 0
    %199 = vmatpush1.bf16.msra.mxu0 0
    %200 = vmatprep.subr.bf16.mxu0 0
    %201 = vmatpush1.bf16.msra.mxu0 0
    %202 = vmatprep.mubr.bf16.mxu0 0
    %203 = vmatmul.mubr.bf16.gmra.mrb[0].mxu0 %v168
    %v204 = vpop.f32.mrb[0].mxu0
    %v205 = vadd.f32 0.0, %v204
    %v206 = vpop.f32.mrb[0].mxu0
    %v207 = vpop.f32.mrb[0].mxu0
    %v208 = vpop.f32.mrb[0].mxu0
    %209 = vdwg.mxu0
    %v210 = vadd.f32 %v143, %v205
    %v211 = vtanh.pop %v210
    %v212 = vpack.c.bf16 %v211, %v211
    %vm213 = vcmask 253952
    %214 = vst.msk [vmem:[#allocation3] sm:$0x1] %vm213, %v212
    %v216 = vsel %vm166, %v212, 0
    %218 = vmatprep.subr.bf16.mxu0 0
    %219 = vmatpush1.bf16.msra.mxu0 %v162
    %220 = vmatprep.subr.bf16.mxu0 0
    %221 = vmatpush1.bf16.msra.mxu0 %v163
    %222 = vmatprep.subr.bf16.mxu0 0
    %223 = vmatpush1.bf16.msra.mxu0 0
    %224 = vmatprep.subr.bf16.mxu0 0
    %225 = vmatpush1.bf16.msra.mxu0 0
    %226 = vmatprep.subr.bf16.mxu0 0
    %227 = vmatpush1.bf16.msra.mxu0 0
    %228 = vmatprep.subr.bf16.mxu0 0
    %229 = vmatpush1.bf16.msra.mxu0 0
    %230 = vmatprep.subr.bf16.mxu0 0
    %231 = vmatpush1.bf16.msra.mxu0 0
    %232 = vmatprep.subr.bf16.mxu0 0
    %233 = vmatpush1.bf16.msra.mxu0 0
    %234 = vmatprep.subr.bf16.mxu0 0
    %235 = vmatpush1.bf16.msra.mxu0 0
    %236 = vmatprep.subr.bf16.mxu0 0
    %237 = vmatpush1.bf16.msra.mxu0 0
    %238 = vmatprep.subr.bf16.mxu0 0
    %239 = vmatpush1.bf16.msra.mxu0 0
    %240 = vmatprep.subr.bf16.mxu0 0
    %241 = vmatpush1.bf16.msra.mxu0 0
    %242 = vmatprep.subr.bf16.mxu0 0
    %243 = vmatpush1.bf16.msra.mxu0 0
    %244 = vmatprep.subr.bf16.mxu0 0
    %245 = vmatpush1.bf16.msra.mxu0 0
    %246 = vmatprep.subr.bf16.mxu0 0
    %247 = vmatpush1.bf16.msra.mxu0 0
    %248 = vmatprep.subr.bf16.mxu0 0
    %249 = vmatpush1.bf16.msra.mxu0 0
    %250 = vmatprep.mubr.bf16.mxu0 0
    %251 = vmatmul.mubr.bf16.gmra.mrb[0].mxu0 %v216
    %v252 = vpop.f32.mrb[0].mxu0
    %v253 = vadd.f32 0.0, %v252
    %v254 = vpop.f32.mrb[0].mxu0
    %v255 = vpop.f32.mrb[0].mxu0
    %v256 = vpop.f32.mrb[0].mxu0
    %257 = vdwg.mxu0
    %v259 = vrot.slane %v253, 6
    %v261 = vadd.f32 %v143, %v259
    %v262 = vtanh.pop %v261
    %v263 = vpack.c.bf16 %v262, %v262
    %vm264 = vcmask 254977
    %265 = vst.msk [vmem:[#allocation3] sm:$0x2] %vm264, %v263
    %v267 = vrot.slane %v263, 1
    %v269 = vsel %vm166, %v267, 0
    %271 = vmatprep.subr.bf16.mxu0 0
    %272 = vmatpush1.bf16.msra.mxu0 %v162
    %273 = vmatprep.subr.bf16.mxu0 0
    %274 = vmatpush1.bf16.msra.mxu0 %v163
    %275 = vmatprep.subr.bf16.mxu0 0
    %276 = vmatpush1.bf16.msra.mxu0 0
    %277 = vmatprep.subr.bf16.mxu0 0
    %278 = vmatpush1.bf16.msra.mxu0 0
    %279 = vmatprep.subr.bf16.mxu0 0
    %280 = vmatpush1.bf16.msra.mxu0 0
    %281 = vmatprep.subr.bf16.mxu0 0
    %282 = vmatpush1.bf16.msra.mxu0 0
    %283 = vmatprep.subr.bf16.mxu0 0
    %284 = vmatpush1.bf16.msra.mxu0 0
    %285 = vmatprep.subr.bf16.mxu0 0
    %286 = vmatpush1.bf16.msra.mxu0 0
    %287 = vmatprep.subr.bf16.mxu0 0
    %288 = vmatpush1.bf16.msra.mxu0 0
    %289 = vmatprep.subr.bf16.mxu0 0
    %290 = vmatpush1.bf16.msra.mxu0 0
    %291 = vmatprep.subr.bf16.mxu0 0
    %292 = vmatpush1.bf16.msra.mxu0 0
    %293 = vmatprep.subr.bf16.mxu0 0
    %294 = vmatpush1.bf16.msra.mxu0 0
    %295 = vmatprep.subr.bf16.mxu0 0
    %296 = vmatpush1.bf16.msra.mxu0 0
    %297 = vmatprep.subr.bf16.mxu0 0
    %298 = vmatpush1.bf16.msra.mxu0 0
    %299 = vmatprep.subr.bf16.mxu0 0
    %300 = vmatpush1.bf16.msra.mxu0 0
    %301 = vmatprep.subr.bf16.mxu0 0
    %302 = vmatpush1.bf16.msra.mxu0 0
    %303 = vmatprep.mubr.bf16.mxu0 0
    %304 = vmatmul.mubr.bf16.gmra.mrb[0].mxu0 %v269
    %v305 = vpop.f32.mrb[0].mxu0
    %v306 = vadd.f32 0.0, %v305
    %v307 = vpop.f32.mrb[0].mxu0
    %v308 = vpop.f32.mrb[0].mxu0
    %v309 = vpop.f32.mrb[0].mxu0
    %310 = vdwg.mxu0
    %v312 = vrot.slane %v306, 4
    %v314 = vadd.f32 %v143, %v312
    %v315 = vtanh.pop %v314
    %v316 = vpack.c.bf16 %v315, %v315
    %vm317 = vcmask 256002
    %318 = vst.msk [vmem:[#allocation3] sm:$0x4] %vm317, %v316
    %v320 = vrot.slane %v316, 2
    %v322 = vsel %vm166, %v320, 0
    %324 = vmatprep.subr.bf16.mxu0 0
    %325 = vmatpush1.bf16.msra.mxu0 %v162
    %326 = vmatprep.subr.bf16.mxu0 0
    %327 = vmatpush1.bf16.msra.mxu0 %v163
    %328 = vmatprep.subr.bf16.mxu0 0
    %329 = vmatpush1.bf16.msra.mxu0 0
    %330 = vmatprep.subr.bf16.mxu0 0
    %331 = vmatpush1.bf16.msra.mxu0 0
    %332 = vmatprep.subr.bf16.mxu0 0
    %333 = vmatpush1.bf16.msra.mxu0 0
    %334 = vmatprep.subr.bf16.mxu0 0
    %335 = vmatpush1.bf16.msra.mxu0 0
    %336 = vmatprep.subr.bf16.mxu0 0
    %337 = vmatpush1.bf16.msra.mxu0 0
    %338 = vmatprep.subr.bf16.mxu0 0
    %339 = vmatpush1.bf16.msra.mxu0 0
    %340 = vmatprep.subr.bf16.mxu0 0
    %341 = vmatpush1.bf16.msra.mxu0 0
    %342 = vmatprep.subr.bf16.mxu0 0
    %343 = vmatpush1.bf16.msra.mxu0 0
    %344 = vmatprep.subr.bf16.mxu0 0
    %345 = vmatpush1.bf16.msra.mxu0 0
    %346 = vmatprep.subr.bf16.mxu0 0
    %347 = vmatpush1.bf16.msra.mxu0 0
    %348 = vmatprep.subr.bf16.mxu0 0
    %349 = vmatpush1.bf16.msra.mxu0 0
    %350 = vmatprep.subr.bf16.mxu0 0
    %351 = vmatpush1.bf16.msra.mxu0 0
    %352 = vmatprep.subr.bf16.mxu0 0
    %353 = vmatpush1.bf16.msra.mxu0 0
    %354 = vmatprep.subr.bf16.mxu0 0
    %355 = vmatpush1.bf16.msra.mxu0 0
    %356 = vmatprep.mubr.bf16.mxu0 0
    %357 = vmatmul.mubr.bf16.gmra.mrb[0].mxu0 %v322
    %v358 = vpop.f32.mrb[0].mxu0
    %v359 = vadd.f32 0.0, %v358
    %v360 = vpop.f32.mrb[0].mxu0
    %v361 = vpop.f32.mrb[0].mxu0
    %v362 = vpop.f32.mrb[0].mxu0
    %363 = vdwg.mxu0
    %v365 = vrot.slane %v359, 2
    %v367 = vadd.f32 %v143, %v365
    %v368 = vtanh.pop %v367
    %v369 = vpack.c.bf16 %v368, %v368
    %vm370 = vcmask 257027
    %371 = vst.msk [vmem:[#allocation3] sm:$0x8] %vm370, %v369
    %v373 = vrot.slane %v369, 3
    %v375 = vsel %vm166, %v373, 0
    %377 = vmatprep.subr.bf16.mxu0 0
    %378 = vmatpush1.bf16.msra.mxu0 %v162
    %379 = vmatprep.subr.bf16.mxu0 0
    %380 = vmatpush1.bf16.msra.mxu0 %v163
    %381 = vmatprep.subr.bf16.mxu0 0
    %382 = vmatpush1.bf16.msra.mxu0 0
    %383 = vmatprep.subr.bf16.mxu0 0
    %384 = vmatpush1.bf16.msra.mxu0 0
    %385 = vmatprep.subr.bf16.mxu0 0
    %386 = vmatpush1.bf16.msra.mxu0 0
    %387 = vmatprep.subr.bf16.mxu0 0
    %388 = vmatpush1.bf16.msra.mxu0 0
    %389 = vmatprep.subr.bf16.mxu0 0
    %390 = vmatpush1.bf16.msra.mxu0 0
    %391 = vmatprep.subr.bf16.mxu0 0
    %392 = vmatpush1.bf16.msra.mxu0 0
    %393 = vmatprep.subr.bf16.mxu0 0
    %394 = vmatpush1.bf16.msra.mxu0 0
    %395 = vmatprep.subr.bf16.mxu0 0
    %396 = vmatpush1.bf16.msra.mxu0 0
    %397 = vmatprep.subr.bf16.mxu0 0
    %398 = vmatpush1.bf16.msra.mxu0 0
    %399 = vmatprep.subr.bf16.mxu0 0
    %400 = vmatpush1.bf16.msra.mxu0 0
    %401 = vmatprep.subr.bf16.mxu0 0
    %402 = vmatpush1.bf16.msra.mxu0 0
    %403 = vmatprep.subr.bf16.mxu0 0
    %404 = vmatpush1.bf16.msra.mxu0 0
    %405 = vmatprep.subr.bf16.mxu0 0
    %406 = vmatpush1.bf16.msra.mxu0 0
    %407 = vmatprep.subr.bf16.mxu0 0
    %408 = vmatpush1.bf16.msra.mxu0 0
    %409 = vmatprep.mubr.bf16.mxu0 0
    %410 = vmatmul.mubr.bf16.gmra.mrb[0].mxu0 %v375
    %v411 = vpop.f32.mrb[0].mxu0
    %v412 = vadd.f32 0.0, %v411
    %v413 = vpop.f32.mrb[0].mxu0
    %v414 = vpop.f32.mrb[0].mxu0
    %v415 = vpop.f32.mrb[0].mxu0
    %416 = vdwg.mxu0
    %v417 = vadd.f32 %v146, %v412
    %v418 = vtanh.pop %v417
    %v419 = vpack.c.bf16 %v418, %v418
    %v421 = vrot.slane %v419, 4
    %vm423 = vcmask 258052
    %424 = vst.msk [vmem:[#allocation3] sm:$0x10] %vm423, %v421
    %v426 = vsel %vm166, %v419, 0
    %428 = vmatprep.subr.bf16.mxu0 0
    %429 = vmatpush1.bf16.msra.mxu0 %v162
    %430 = vmatprep.subr.bf16.mxu0 0
    %431 = vmatpush1.bf16.msra.mxu0 %v163
    %432 = vmatprep.subr.bf16.mxu0 0
    %433 = vmatpush1.bf16.msra.mxu0 0
    %434 = vmatprep.subr.bf16.mxu0 0
    %435 = vmatpush1.bf16.msra.mxu0 0
    %436 = vmatprep.subr.bf16.mxu0 0
    %437 = vmatpush1.bf16.msra.mxu0 0
    %438 = vmatprep.subr.bf16.mxu0 0
    %439 = vmatpush1.bf16.msra.mxu0 0
    %440 = vmatprep.subr.bf16.mxu0 0
    %441 = vmatpush1.bf16.msra.mxu0 0
    %442 = vmatprep.subr.bf16.mxu0 0
    %443 = vmatpush1.bf16.msra.mxu0 0
    %444 = vmatprep.subr.bf16.mxu0 0
    %445 = vmatpush1.bf16.msra.mxu0 0
    %446 = vmatprep.subr.bf16.mxu0 0
    %447 = vmatpush1.bf16.msra.mxu0 0
    %448 = vmatprep.subr.bf16.mxu0 0
    %449 = vmatpush1.bf16.msra.mxu0 0
    %450 = vmatprep.subr.bf16.mxu0 0
    %451 = vmatpush1.bf16.msra.mxu0 0
    %452 = vmatprep.subr.bf16.mxu0 0
    %453 = vmatpush1.bf16.msra.mxu0 0
    %454 = vmatprep.subr.bf16.mxu0 0
    %455 = vmatpush1.bf16.msra.mxu0 0
    %456 = vmatprep.subr.bf16.mxu0 0
    %457 = vmatpush1.bf16.msra.mxu0 0
    %458 = vmatprep.subr.bf16.mxu0 0
    %459 = vmatpush1.bf16.msra.mxu0 0
    %460 = vmatprep.mubr.bf16.mxu0 0
    %461 = vmatmul.mubr.bf16.gmra.mrb[0].mxu0 %v426
    %v462 = vpop.f32.mrb[0].mxu0
    %v463 = vadd.f32 0.0, %v462
    %v464 = vpop.f32.mrb[0].mxu0
    %v465 = vpop.f32.mrb[0].mxu0
    %v466 = vpop.f32.mrb[0].mxu0
    %467 = vdwg.mxu0
    %v469 = vrot.slane %v463, 6
    %v471 = vadd.f32 %v146, %v469
    %v472 = vtanh.pop %v471
    %v473 = vpack.c.bf16 %v472, %v472
    %v475 = vrot.slane %v473, 4
    %vm477 = vcmask 259077
    %478 = vst.msk [vmem:[#allocation3] sm:$0x20] %vm477, %v475
    %v479 = vrot.slane %v473, 1
    %v481 = vsel %vm166, %v479, 0
    %483 = vmatprep.subr.bf16.mxu0 0
    %484 = vmatpush1.bf16.msra.mxu0 %v162
    %485 = vmatprep.subr.bf16.mxu0 0
    %486 = vmatpush1.bf16.msra.mxu0 %v163
    %487 = vmatprep.subr.bf16.mxu0 0
    %488 = vmatpush1.bf16.msra.mxu0 0
    %489 = vmatprep.subr.bf16.mxu0 0
    %490 = vmatpush1.bf16.msra.mxu0 0
    %491 = vmatprep.subr.bf16.mxu0 0
    %492 = vmatpush1.bf16.msra.mxu0 0
    %493 = vmatprep.subr.bf16.mxu0 0
    %494 = vmatpush1.bf16.msra.mxu0 0
    %495 = vmatprep.subr.bf16.mxu0 0
    %496 = vmatpush1.bf16.msra.mxu0 0
    %497 = vmatprep.subr.bf16.mxu0 0
    %498 = vmatpush1.bf16.msra.mxu0 0
    %499 = vmatprep.subr.bf16.mxu0 0
    %500 = vmatpush1.bf16.msra.mxu0 0
    %501 = vmatprep.subr.bf16.mxu0 0
    %502 = vmatpush1.bf16.msra.mxu0 0
    %503 = vmatprep.subr.bf16.mxu0 0
    %504 = vmatpush1.bf16.msra.mxu0 0
    %505 = vmatprep.subr.bf16.mxu0 0
    %506 = vmatpush1.bf16.msra.mxu0 0
    %507 = vmatprep.subr.bf16.mxu0 0
    %508 = vmatpush1.bf16.msra.mxu0 0
    %509 = vmatprep.subr.bf16.mxu0 0
    %510 = vmatpush1.bf16.msra.mxu0 0
    %511 = vmatprep.subr.bf16.mxu0 0
    %512 = vmatpush1.bf16.msra.mxu0 0
    %513 = vmatprep.subr.bf16.mxu0 0
    %514 = vmatpush1.bf16.msra.mxu0 0
    %515 = vmatprep.mubr.bf16.mxu0 0
    %516 = vmatmul.mubr.bf16.gmra.mrb[0].mxu0 %v481
    %v517 = vpop.f32.mrb[0].mxu0
    %v518 = vadd.f32 0.0, %v517
    %v519 = vpop.f32.mrb[0].mxu0
    %v520 = vpop.f32.mrb[0].mxu0
    %v521 = vpop.f32.mrb[0].mxu0
    %522 = vdwg.mxu0
    %v524 = vrot.slane %v518, 4
    %v526 = vadd.f32 %v146, %v524
    %v527 = vtanh.pop %v526
    %v528 = vpack.c.bf16 %v527, %v527
    %v530 = vrot.slane %v528, 4
    %vm532 = vcmask 260102
    %533 = vst.msk [vmem:[#allocation3] sm:$0x40] %vm532, %v530
    %v534 = vrot.slane %v528, 2
    %v536 = vsel %vm166, %v534, 0
    %538 = vmatprep.subr.bf16.mxu0 0
    %539 = vmatpush1.bf16.msra.mxu0 %v162
    %540 = vmatprep.subr.bf16.mxu0 0
    %541 = vmatpush1.bf16.msra.mxu0 %v163
    %542 = vmatprep.subr.bf16.mxu0 0
    %543 = vmatpush1.bf16.msra.mxu0 0
    %544 = vmatprep.subr.bf16.mxu0 0
    %545 = vmatpush1.bf16.msra.mxu0 0
    %546 = vmatprep.subr.bf16.mxu0 0
    %547 = vmatpush1.bf16.msra.mxu0 0
    %548 = vmatprep.subr.bf16.mxu0 0
    %549 = vmatpush1.bf16.msra.mxu0 0
    %550 = vmatprep.subr.bf16.mxu0 0
    %551 = vmatpush1.bf16.msra.mxu0 0
    %552 = vmatprep.subr.bf16.mxu0 0
    %553 = vmatpush1.bf16.msra.mxu0 0
    %554 = vmatprep.subr.bf16.mxu0 0
    %555 = vmatpush1.bf16.msra.mxu0 0
    %556 = vmatprep.subr.bf16.mxu0 0
    %557 = vmatpush1.bf16.msra.mxu0 0
    %558 = vmatprep.subr.bf16.mxu0 0
    %559 = vmatpush1.bf16.msra.mxu0 0
    %560 = vmatprep.subr.bf16.mxu0 0
    %561 = vmatpush1.bf16.msra.mxu0 0
    %562 = vmatprep.subr.bf16.mxu0 0
    %563 = vmatpush1.bf16.msra.mxu0 0
    %564 = vmatprep.subr.bf16.mxu0 0
    %565 = vmatpush1.bf16.msra.mxu0 0
    %566 = vmatprep.subr.bf16.mxu0 0
    %567 = vmatpush1.bf16.msra.mxu0 0
    %568 = vmatprep.subr.bf16.mxu0 0
    %569 = vmatpush1.bf16.msra.mxu0 0
    %570 = vmatprep.mubr.bf16.mxu0 0
    %571 = vmatmul.mubr.bf16.gmra.mrb[0].mxu0 %v536
    %v572 = vpop.f32.mrb[0].mxu0
    %v573 = vadd.f32 0.0, %v572
    %v574 = vpop.f32.mrb[0].mxu0
    %v575 = vpop.f32.mrb[0].mxu0
    %v576 = vpop.f32.mrb[0].mxu0
    %577 = vdwg.mxu0
    %v579 = vrot.slane %v573, 2
    %v581 = vadd.f32 %v146, %v579
    %v582 = vtanh.pop %v581
    %v583 = vpack.c.bf16 %v582, %v582
    %v585 = vrot.slane %v583, 4
    %vm587 = vcmask 261127
    %588 = vst.msk [vmem:[#allocation3] sm:$0x80] %vm587, %v585
    %v590 = vunpack.c.l.s4 1966171168
    %v591 = vunpack.c.0.s8 %v590
    %v592 = vlaneseq
    %v593 = vshrl.u32 %v592, 7
    %v594 = vsub.s32 %v591, %v593
    %v595 = vrot.slane %v583, %v594
    %v596 = vcombine.high %v595, %v595
    %v598 = vunpack.c.l.s4 1966171168
    %v599 = vunpack.c.0.s8 %v598
    %v600 = vlaneseq
    %v601 = vshrl.u32 %v600, 7
    %v602 = vsub.s32 %v599, %v601
    %v603 = vrot.slane %v596, %v602
    %v604 = vcombine.high %v603, %v603
    %606 = vst.msk [vmem:[#allocation2] sm:$0x1] %vm213, %v604
    %v607 = vld [vmem:[#allocation3] sm:$0xff]
    %v608 = vld [vmem:[%s4] sm:$0xf]
    %v609 = vld [vmem:[%s4 + $0x4] sm:$0xf]
    %v610 = vld [vmem:[%s4 + $0x8] sm:$0xf]
    %v611 = vld [vmem:[%s4 + $0xc] sm:$0xf]
    %v612 = vld [vmem:[%s6] sm:$0x1]
    %v614 = vlaneseq
    %v615 = vshrl.u32 %v614, 7
    %v616 = vsub.s32 0, %v615
    %v617 = vrot.slane %v612, %v616
    %v623 = vunpack.c.l.b16 %v608
    %v624 = vunpack.c.l.b16 %v609
    %v625 = vunpack.c.l.b16 %v610
    %v626 = vunpack.c.l.b16 %v611
    %v627 = vpack.c.b16 %v624, %v623
    %v628 = vpack.c.b16 %v626, %v625
    %v632 = vsel %vm166, %v607, 0
    %634 = vmatprep.subr.bf16.mxu0 0
    %635 = vmatpush1.bf16.msra.mxu0 %v627
    %636 = vmatprep.subr.bf16.mxu0 0
    %637 = vmatpush1.bf16.msra.mxu0 %v628
    %638 = vmatprep.subr.bf16.mxu0 0
    %639 = vmatpush1.bf16.msra.mxu0 0
    %640 = vmatprep.subr.bf16.mxu0 0
    %641 = vmatpush1.bf16.msra.mxu0 0
    %642 = vmatprep.subr.bf16.mxu0 0
    %643 = vmatpush1.bf16.msra.mxu0 0
    %644 = vmatprep.subr.bf16.mxu0 0
    %645 = vmatpush1.bf16.msra.mxu0 0
    %646 = vmatprep.subr.bf16.mxu0 0
    %647 = vmatpush1.bf16.msra.mxu0 0
    %648 = vmatprep.subr.bf16.mxu0 0
    %649 = vmatpush1.bf16.msra.mxu0 0
    %650 = vmatprep.subr.bf16.mxu0 0
    %651 = vmatpush1.bf16.msra.mxu0 0
    %652 = vmatprep.subr.bf16.mxu0 0
    %653 = vmatpush1.bf16.msra.mxu0 0
    %654 = vmatprep.subr.bf16.mxu0 0
    %655 = vmatpush1.bf16.msra.mxu0 0
    %656 = vmatprep.subr.bf16.mxu0 0
    %657 = vmatpush1.bf16.msra.mxu0 0
    %658 = vmatprep.subr.bf16.mxu0 0
    %659 = vmatpush1.bf16.msra.mxu0 0
    %660 = vmatprep.subr.bf16.mxu0 0
    %661 = vmatpush1.bf16.msra.mxu0 0
    %662 = vmatprep.subr.bf16.mxu0 0
    %663 = vmatpush1.bf16.msra.mxu0 0
    %664 = vmatprep.subr.bf16.mxu0 0
    %665 = vmatpush1.bf16.msra.mxu0 0
    %666 = vmatprep.mubr.bf16.mxu0 0
    %667 = vmatmul.mubr.bf16.gmra.mrb[0].mxu0 %v632
    %v668 = vpop.f32.mrb[0].mxu0
    %v669 = vadd.f32 %v617, %v668
    %v670 = vpop.f32.mrb[0].mxu0
    %v671 = vpop.f32.mrb[0].mxu0
    %v672 = vadd.f32 %v617, %v671
    %v673 = vpop.f32.mrb[0].mxu0
    %674 = vdwg.mxu0
    %v675 = vld [vmem:[#allocation9] sm:$0xf]
    %v676 = vld [vmem:[#allocation9 + $0x4] sm:$0xf]
    %v677 = vld [vmem:[#allocation9 + $0x8] sm:$0xf]
    %v678 = vld [vmem:[#allocation9 + $0xc] sm:$0xf]
    %s679 = scalar_lea.vmem [#allocation2], 1
    %v680 = vld [vmem:[%s679] sm:$0x1]
    %v685 = vunpack.c.l.b16 %v675
    %v686 = vunpack.c.l.b16 %v676
    %v687 = vunpack.c.l.b16 %v677
    %v688 = vunpack.c.l.b16 %v678
    %v689 = vpack.c.b16 %v686, %v685
    %v690 = vpack.c.b16 %v688, %v687
    %v694 = vsel %vm166, %v680, 0
    %696 = vmatprep.subr.bf16.mxu0 0
    %697 = vmatpush1.bf16.msra.mxu0 %v689
    %698 = vmatprep.subr.bf16.mxu0 0
    %699 = vmatpush1.bf16.msra.mxu0 %v690
    %700 = vmatprep.subr.bf16.mxu0 0
    %701 = vmatpush1.bf16.msra.mxu0 0
    %702 = vmatprep.subr.bf16.mxu0 0
    %703 = vmatpush1.bf16.msra.mxu0 0
    %704 = vmatprep.subr.bf16.mxu0 0
    %705 = vmatpush1.bf16.msra.mxu0 0
    %706 = vmatprep.subr.bf16.mxu0 0
    %707 = vmatpush1.bf16.msra.mxu0 0
    %708 = vmatprep.subr.bf16.mxu0 0
    %709 = vmatpush1.bf16.msra.mxu0 0
    %710 = vmatprep.subr.bf16.mxu0 0
    %711 = vmatpush1.bf16.msra.mxu0 0
    %712 = vmatprep.subr.bf16.mxu0 0
    %713 = vmatpush1.bf16.msra.mxu0 0
    %714 = vmatprep.subr.bf16.mxu0 0
    %715 = vmatpush1.bf16.msra.mxu0 0
    %716 = vmatprep.subr.bf16.mxu0 0
    %717 = vmatpush1.bf16.msra.mxu0 0
    %718 = vmatprep.subr.bf16.mxu0 0
    %719 = vmatpush1.bf16.msra.mxu0 0
    %720 = vmatprep.subr.bf16.mxu0 0
    %721 = vmatpush1.bf16.msra.mxu0 0
    %722 = vmatprep.subr.bf16.mxu0 0
    %723 = vmatpush1.bf16.msra.mxu0 0
    %724 = vmatprep.subr.bf16.mxu0 0
    %725 = vmatpush1.bf16.msra.mxu0 0
    %726 = vmatprep.subr.bf16.mxu0 0
    %727 = vmatpush1.bf16.msra.mxu0 0
    %728 = vmatprep.mubr.bf16.mxu0 0
    %729 = vmatmul.mubr.bf16.gmra.mrb[0].mxu0 %v694
    %v730 = vpop.f32.mrb[0].mxu0
    %v731 = vadd.f32 0.0, %v730
    %v732 = vpop.f32.mrb[0].mxu0
    %v733 = vpop.f32.mrb[0].mxu0
    %v734 = vpop.f32.mrb[0].mxu0
    %735 = vdwg.mxu0
    %v736 = vadd.f32 %v669, %v731
    %v737 = vtanh.pop %v736
    %v738 = vpack.c.bf16 %v737, %v737
    %v740 = vsel %vm166, %v738, 0
    %742 = vmatprep.subr.bf16.mxu0 0
    %743 = vmatpush1.bf16.msra.mxu0 %v689
    %744 = vmatprep.subr.bf16.mxu0 0
    %745 = vmatpush1.bf16.msra.mxu0 %v690
    %746 = vmatprep.subr.bf16.mxu0 0
    %747 = vmatpush1.bf16.msra.mxu0 0
    %748 = vmatprep.subr.bf16.mxu0 0
    %749 = vmatpush1.bf16.msra.mxu0 0
    %750 = vmatprep.subr.bf16.mxu0 0
    %751 = vmatpush1.bf16.msra.mxu0 0
    %752 = vmatprep.subr.bf16.mxu0 0
    %753 = vmatpush1.bf16.msra.mxu0 0
    %754 = vmatprep.subr.bf16.mxu0 0
    %755 = vmatpush1.bf16.msra.mxu0 0
    %756 = vmatprep.subr.bf16.mxu0 0
    %757 = vmatpush1.bf16.msra.mxu0 0
    %758 = vmatprep.subr.bf16.mxu0 0
    %759 = vmatpush1.bf16.msra.mxu0 0
    %760 = vmatprep.subr.bf16.mxu0 0
    %761 = vmatpush1.bf16.msra.mxu0 0
    %762 = vmatprep.subr.bf16.mxu0 0
    %763 = vmatpush1.bf16.msra.mxu0 0
    %764 = vmatprep.subr.bf16.mxu0 0
    %765 = vmatpush1.bf16.msra.mxu0 0
    %766 = vmatprep.subr.bf16.mxu0 0
    %767 = vmatpush1.bf16.msra.mxu0 0
    %768 = vmatprep.subr.bf16.mxu0 0
    %769 = vmatpush1.bf16.msra.mxu0 0
    %770 = vmatprep.subr.bf16.mxu0 0
    %771 = vmatpush1.bf16.msra.mxu0 0
    %772 = vmatprep.subr.bf16.mxu0 0
    %773 = vmatpush1.bf16.msra.mxu0 0
    %774 = vmatprep.mubr.bf16.mxu0 0
    %775 = vmatmul.mubr.bf16.gmra.mrb[0].mxu0 %v740
    %v776 = vpop.f32.mrb[0].mxu0
    %v777 = vadd.f32 0.0, %v776
    %v778 = vpop.f32.mrb[0].mxu0
    %v779 = vpop.f32.mrb[0].mxu0
    %v780 = vpop.f32.mrb[0].mxu0
    %781 = vdwg.mxu0
    %v783 = vrot.slane %v777, 6
    %v785 = vadd.f32 %v669, %v783
    %v786 = vtanh.pop %v785
    %v787 = vpack.c.bf16 %v786, %v786
    %v789 = vrot.slane %v787, 1
    %v791 = vsel %vm166, %v789, 0
    %793 = vmatprep.subr.bf16.mxu0 0
    %794 = vmatpush1.bf16.msra.mxu0 %v689
    %795 = vmatprep.subr.bf16.mxu0 0
    %796 = vmatpush1.bf16.msra.mxu0 %v690
    %797 = vmatprep.subr.bf16.mxu0 0
    %798 = vmatpush1.bf16.msra.mxu0 0
    %799 = vmatprep.subr.bf16.mxu0 0
    %800 = vmatpush1.bf16.msra.mxu0 0
    %801 = vmatprep.subr.bf16.mxu0 0
    %802 = vmatpush1.bf16.msra.mxu0 0
    %803 = vmatprep.subr.bf16.mxu0 0
    %804 = vmatpush1.bf16.msra.mxu0 0
    %805 = vmatprep.subr.bf16.mxu0 0
    %806 = vmatpush1.bf16.msra.mxu0 0
    %807 = vmatprep.subr.bf16.mxu0 0
    %808 = vmatpush1.bf16.msra.mxu0 0
    %809 = vmatprep.subr.bf16.mxu0 0
    %810 = vmatpush1.bf16.msra.mxu0 0
    %811 = vmatprep.subr.bf16.mxu0 0
    %812 = vmatpush1.bf16.msra.mxu0 0
    %813 = vmatprep.subr.bf16.mxu0 0
    %814 = vmatpush1.bf16.msra.mxu0 0
    %815 = vmatprep.subr.bf16.mxu0 0
    %816 = vmatpush1.bf16.msra.mxu0 0
    %817 = vmatprep.subr.bf16.mxu0 0
    %818 = vmatpush1.bf16.msra.mxu0 0
    %819 = vmatprep.subr.bf16.mxu0 0
    %820 = vmatpush1.bf16.msra.mxu0 0
    %821 = vmatprep.subr.bf16.mxu0 0
    %822 = vmatpush1.bf16.msra.mxu0 0
    %823 = vmatprep.subr.bf16.mxu0 0
    %824 = vmatpush1.bf16.msra.mxu0 0
    %825 = vmatprep.mubr.bf16.mxu0 0
    %826 = vmatmul.mubr.bf16.gmra.mrb[0].mxu0 %v791
    %v827 = vpop.f32.mrb[0].mxu0
    %v828 = vadd.f32 0.0, %v827
    %v829 = vpop.f32.mrb[0].mxu0
    %v830 = vpop.f32.mrb[0].mxu0
    %v831 = vpop.f32.mrb[0].mxu0
    %832 = vdwg.mxu0
    %v834 = vrot.slane %v828, 4
    %v836 = vadd.f32 %v669, %v834
    %v837 = vtanh.pop %v836
    %v838 = vpack.c.bf16 %v837, %v837
    %v840 = vrot.slane %v838, 2
    %v842 = vsel %vm166, %v840, 0
    %844 = vmatprep.subr.bf16.mxu0 0
    %845 = vmatpush1.bf16.msra.mxu0 %v689
    %846 = vmatprep.subr.bf16.mxu0 0
    %847 = vmatpush1.bf16.msra.mxu0 %v690
    %848 = vmatprep.subr.bf16.mxu0 0
    %849 = vmatpush1.bf16.msra.mxu0 0
    %850 = vmatprep.subr.bf16.mxu0 0
    %851 = vmatpush1.bf16.msra.mxu0 0
    %852 = vmatprep.subr.bf16.mxu0 0
    %853 = vmatpush1.bf16.msra.mxu0 0
    %854 = vmatprep.subr.bf16.mxu0 0
    %855 = vmatpush1.bf16.msra.mxu0 0
    %856 = vmatprep.subr.bf16.mxu0 0
    %857 = vmatpush1.bf16.msra.mxu0 0
    %858 = vmatprep.subr.bf16.mxu0 0
    %859 = vmatpush1.bf16.msra.mxu0 0
    %860 = vmatprep.subr.bf16.mxu0 0
    %861 = vmatpush1.bf16.msra.mxu0 0
    %862 = vmatprep.subr.bf16.mxu0 0
    %863 = vmatpush1.bf16.msra.mxu0 0
    %864 = vmatprep.subr.bf16.mxu0 0
    %865 = vmatpush1.bf16.msra.mxu0 0
    %866 = vmatprep.subr.bf16.mxu0 0
    %867 = vmatpush1.bf16.msra.mxu0 0
    %868 = vmatprep.subr.bf16.mxu0 0
    %869 = vmatpush1.bf16.msra.mxu0 0
    %870 = vmatprep.subr.bf16.mxu0 0
    %871 = vmatpush1.bf16.msra.mxu0 0
    %872 = vmatprep.subr.bf16.mxu0 0
    %873 = vmatpush1.bf16.msra.mxu0 0
    %874 = vmatprep.subr.bf16.mxu0 0
    %875 = vmatpush1.bf16.msra.mxu0 0
    %876 = vmatprep.mubr.bf16.mxu0 0
    %877 = vmatmul.mubr.bf16.gmra.mrb[0].mxu0 %v842
    %v878 = vpop.f32.mrb[0].mxu0
    %v879 = vadd.f32 0.0, %v878
    %v880 = vpop.f32.mrb[0].mxu0
    %v881 = vpop.f32.mrb[0].mxu0
    %v882 = vpop.f32.mrb[0].mxu0
    %883 = vdwg.mxu0
    %v885 = vrot.slane %v879, 2
    %v887 = vadd.f32 %v669, %v885
    %v888 = vtanh.pop %v887
    %v889 = vpack.c.bf16 %v888, %v888
    %v891 = vrot.slane %v889, 3
    %v893 = vsel %vm166, %v891, 0
    %895 = vmatprep.subr.bf16.mxu0 0
    %896 = vmatpush1.bf16.msra.mxu0 %v689
    %897 = vmatprep.subr.bf16.mxu0 0
    %898 = vmatpush1.bf16.msra.mxu0 %v690
    %899 = vmatprep.subr.bf16.mxu0 0
    %900 = vmatpush1.bf16.msra.mxu0 0
    %901 = vmatprep.subr.bf16.mxu0 0
    %902 = vmatpush1.bf16.msra.mxu0 0
    %903 = vmatprep.subr.bf16.mxu0 0
    %904 = vmatpush1.bf16.msra.mxu0 0
    %905 = vmatprep.subr.bf16.mxu0 0
    %906 = vmatpush1.bf16.msra.mxu0 0
    %907 = vmatprep.subr.bf16.mxu0 0
    %908 = vmatpush1.bf16.msra.mxu0 0
    %909 = vmatprep.subr.bf16.mxu0 0
    %910 = vmatpush1.bf16.msra.mxu0 0
    %911 = vmatprep.subr.bf16.mxu0 0
    %912 = vmatpush1.bf16.msra.mxu0 0
    %913 = vmatprep.subr.bf16.mxu0 0
    %914 = vmatpush1.bf16.msra.mxu0 0
    %915 = vmatprep.subr.bf16.mxu0 0
    %916 = vmatpush1.bf16.msra.mxu0 0
    %917 = vmatprep.subr.bf16.mxu0 0
    %918 = vmatpush1.bf16.msra.mxu0 0
    %919 = vmatprep.subr.bf16.mxu0 0
    %920 = vmatpush1.bf16.msra.mxu0 0
    %921 = vmatprep.subr.bf16.mxu0 0
    %922 = vmatpush1.bf16.msra.mxu0 0
    %923 = vmatprep.subr.bf16.mxu0 0
    %924 = vmatpush1.bf16.msra.mxu0 0
    %925 = vmatprep.subr.bf16.mxu0 0
    %926 = vmatpush1.bf16.msra.mxu0 0
    %927 = vmatprep.mubr.bf16.mxu0 0
    %928 = vmatmul.mubr.bf16.gmra.mrb[0].mxu0 %v893
    %v929 = vpop.f32.mrb[0].mxu0
    %v930 = vadd.f32 0.0, %v929
    %v931 = vpop.f32.mrb[0].mxu0
    %v932 = vpop.f32.mrb[0].mxu0
    %v933 = vpop.f32.mrb[0].mxu0
    %934 = vdwg.mxu0
    %v935 = vadd.f32 %v672, %v930
    %v936 = vtanh.pop %v935
    %v937 = vpack.c.bf16 %v936, %v936
    %v939 = vsel %vm166, %v937, 0
    %941 = vmatprep.subr.bf16.mxu0 0
    %942 = vmatpush1.bf16.msra.mxu0 %v689
    %943 = vmatprep.subr.bf16.mxu0 0
    %944 = vmatpush1.bf16.msra.mxu0 %v690
    %945 = vmatprep.subr.bf16.mxu0 0
    %946 = vmatpush1.bf16.msra.mxu0 0
    %947 = vmatprep.subr.bf16.mxu0 0
    %948 = vmatpush1.bf16.msra.mxu0 0
    %949 = vmatprep.subr.bf16.mxu0 0
    %950 = vmatpush1.bf16.msra.mxu0 0
    %951 = vmatprep.subr.bf16.mxu0 0
    %952 = vmatpush1.bf16.msra.mxu0 0
    %953 = vmatprep.subr.bf16.mxu0 0
    %954 = vmatpush1.bf16.msra.mxu0 0
    %955 = vmatprep.subr.bf16.mxu0 0
    %956 = vmatpush1.bf16.msra.mxu0 0
    %957 = vmatprep.subr.bf16.mxu0 0
    %958 = vmatpush1.bf16.msra.mxu0 0
    %959 = vmatprep.subr.bf16.mxu0 0
    %960 = vmatpush1.bf16.msra.mxu0 0
    %961 = vmatprep.subr.bf16.mxu0 0
    %962 = vmatpush1.bf16.msra.mxu0 0
    %963 = vmatprep.subr.bf16.mxu0 0
    %964 = vmatpush1.bf16.msra.mxu0 0
    %965 = vmatprep.subr.bf16.mxu0 0
    %966 = vmatpush1.bf16.msra.mxu0 0
    %967 = vmatprep.subr.bf16.mxu0 0
    %968 = vmatpush1.bf16.msra.mxu0 0
    %969 = vmatprep.subr.bf16.mxu0 0
    %970 = vmatpush1.bf16.msra.mxu0 0
    %971 = vmatprep.subr.bf16.mxu0 0
    %972 = vmatpush1.bf16.msra.mxu0 0
    %973 = vmatprep.mubr.bf16.mxu0 0
    %974 = vmatmul.mubr.bf16.gmra.mrb[0].mxu0 %v939
    %v975 = vpop.f32.mrb[0].mxu0
    %v976 = vadd.f32 0.0, %v975
    %v977 = vpop.f32.mrb[0].mxu0
    %v978 = vpop.f32.mrb[0].mxu0
    %v979 = vpop.f32.mrb[0].mxu0
    %980 = vdwg.mxu0
    %v982 = vrot.slane %v976, 6
    %v984 = vadd.f32 %v672, %v982
    %v985 = vtanh.pop %v984
    %v986 = vpack.c.bf16 %v985, %v985
    %v988 = vrot.slane %v986, 1
    %v990 = vsel %vm166, %v988, 0
    %992 = vmatprep.subr.bf16.mxu0 0
    %993 = vmatpush1.bf16.msra.mxu0 %v689
    %994 = vmatprep.subr.bf16.mxu0 0
    %995 = vmatpush1.bf16.msra.mxu0 %v690
    %996 = vmatprep.subr.bf16.mxu0 0
    %997 = vmatpush1.bf16.msra.mxu0 0
    %998 = vmatprep.subr.bf16.mxu0 0
    %999 = vmatpush1.bf16.msra.mxu0 0
    %1000 = vmatprep.subr.bf16.mxu0 0
    %1001 = vmatpush1.bf16.msra.mxu0 0
    %1002 = vmatprep.subr.bf16.mxu0 0
    %1003 = vmatpush1.bf16.msra.mxu0 0
    %1004 = vmatprep.subr.bf16.mxu0 0
    %1005 = vmatpush1.bf16.msra.mxu0 0
    %1006 = vmatprep.subr.bf16.mxu0 0
    %1007 = vmatpush1.bf16.msra.mxu0 0
    %1008 = vmatprep.subr.bf16.mxu0 0
    %1009 = vmatpush1.bf16.msra.mxu0 0
    %1010 = vmatprep.subr.bf16.mxu0 0
    %1011 = vmatpush1.bf16.msra.mxu0 0
    %1012 = vmatprep.subr.bf16.mxu0 0
    %1013 = vmatpush1.bf16.msra.mxu0 0
    %1014 = vmatprep.subr.bf16.mxu0 0
    %1015 = vmatpush1.bf16.msra.mxu0 0
    %1016 = vmatprep.subr.bf16.mxu0 0
    %1017 = vmatpush1.bf16.msra.mxu0 0
    %1018 = vmatprep.subr.bf16.mxu0 0
    %1019 = vmatpush1.bf16.msra.mxu0 0
    %1020 = vmatprep.subr.bf16.mxu0 0
    %1021 = vmatpush1.bf16.msra.mxu0 0
    %1022 = vmatprep.subr.bf16.mxu0 0
    %1023 = vmatpush1.bf16.msra.mxu0 0
    %1024 = vmatprep.mubr.bf16.mxu0 0
    %1025 = vmatmul.mubr.bf16.gmra.mrb[0].mxu0 %v990
    %v1026 = vpop.f32.mrb[0].mxu0
    %v1027 = vadd.f32 0.0, %v1026
    %v1028 = vpop.f32.mrb[0].mxu0
    %v1029 = vpop.f32.mrb[0].mxu0
    %v1030 = vpop.f32.mrb[0].mxu0
    %1031 = vdwg.mxu0
    %v1033 = vrot.slane %v1027, 4
    %v1035 = vadd.f32 %v672, %v1033
    %v1036 = vtanh.pop %v1035
    %v1037 = vpack.c.bf16 %v1036, %v1036
    %v1039 = vrot.slane %v1037, 2
    %v1041 = vsel %vm166, %v1039, 0
    %1043 = vmatprep.subr.bf16.mxu0 0
    %1044 = vmatpush1.bf16.msra.mxu0 %v689
    %1045 = vmatprep.subr.bf16.mxu0 0
    %1046 = vmatpush1.bf16.msra.mxu0 %v690
    %1047 = vmatprep.subr.bf16.mxu0 0
    %1048 = vmatpush1.bf16.msra.mxu0 0
    %1049 = vmatprep.subr.bf16.mxu0 0
    %1050 = vmatpush1.bf16.msra.mxu0 0
    %1051 = vmatprep.subr.bf16.mxu0 0
    %1052 = vmatpush1.bf16.msra.mxu0 0
    %1053 = vmatprep.subr.bf16.mxu0 0
    %1054 = vmatpush1.bf16.msra.mxu0 0
    %1055 = vmatprep.subr.bf16.mxu0 0
    %1056 = vmatpush1.bf16.msra.mxu0 0
    %1057 = vmatprep.subr.bf16.mxu0 0
    %1058 = vmatpush1.bf16.msra.mxu0 0
    %1059 = vmatprep.subr.bf16.mxu0 0
    %1060 = vmatpush1.bf16.msra.mxu0 0
    %1061 = vmatprep.subr.bf16.mxu0 0
    %1062 = vmatpush1.bf16.msra.mxu0 0
    %1063 = vmatprep.subr.bf16.mxu0 0
    %1064 = vmatpush1.bf16.msra.mxu0 0
    %1065 = vmatprep.subr.bf16.mxu0 0
    %1066 = vmatpush1.bf16.msra.mxu0 0
    %1067 = vmatprep.subr.bf16.mxu0 0
    %1068 = vmatpush1.bf16.msra.mxu0 0
    %1069 = vmatprep.subr.bf16.mxu0 0
    %1070 = vmatpush1.bf16.msra.mxu0 0
    %1071 = vmatprep.subr.bf16.mxu0 0
    %1072 = vmatpush1.bf16.msra.mxu0 0
    %1073 = vmatprep.subr.bf16.mxu0 0
    %1074 = vmatpush1.bf16.msra.mxu0 0
    %1075 = vmatprep.mubr.bf16.mxu0 0
    %1076 = vmatmul.mubr.bf16.gmra.mrb[0].mxu0 %v1041
    %v1077 = vpop.f32.mrb[0].mxu0
    %v1078 = vadd.f32 0.0, %v1077
    %v1079 = vpop.f32.mrb[0].mxu0
    %v1080 = vpop.f32.mrb[0].mxu0
    %v1081 = vpop.f32.mrb[0].mxu0
    %1082 = vdwg.mxu0
    %v1084 = vrot.slane %v1078, 2
    %v1086 = vadd.f32 %v672, %v1084
    %v1087 = vtanh.pop %v1086
    %v1088 = vpack.c.bf16 %v1087, %v1087
    %v1091 = vunpack.c.l.s4 1966171168
    %v1092 = vunpack.c.0.s8 %v1091
    %v1093 = vlaneseq
    %v1094 = vshrl.u32 %v1093, 7
    %v1095 = vsub.s32 %v1092, %v1094
    %v1096 = vrot.slane %v1088, %v1095
    %v1097 = vcombine.high %v1096, %v1096
    %v1099 = vunpack.c.l.s4 1966171168
    %v1100 = vunpack.c.0.s8 %v1099
    %v1101 = vlaneseq
    %v1102 = vshrl.u32 %v1101, 7
    %v1103 = vsub.s32 %v1100, %v1102
    %v1104 = vrot.slane %v1097, %v1103
    %v1105 = vcombine.high %v1104, %v1104
    %1107 = vst.msk [vmem:[%s679] sm:$0x1] %vm213, %v1105
    // Predicated region
    $region54: #{tpu_custom_call.1} parent=1 // pred_check
      %p1108 = pneg %p75
    $region55: #{tpu_custom_call.1} parent=1 // pred_check_branch
      %1110 = sbr.rel (%p1108) target = $region57
    $region56: #{tpu_custom_call.1} parent=1 // pred_region
      %v1111 = vld [vmem:[%s7] sm:$0xf]
      %v1112 = vld [vmem:[%s7 + $0x4] sm:$0xf]
      %v1113 = vld [vmem:[%s7 + $0x8] sm:$0xf]
      %v1114 = vld [vmem:[%s7 + $0xc] sm:$0xf]
      %v1115 = vld [vmem:[%s8] sm:$0x1]
      %v1117 = vlaneseq
      %v1118 = vshrl.u32 %v1117, 7
      %v1119 = vsub.s32 0, %v1118
      %v1120 = vrot.slane %v1115, %v1119
      %v1122 = vrot.slane %v1088, 3
      %v1127 = vunpack.c.l.b16 %v1111
      %v1128 = vunpack.c.l.b16 %v1112
      %v1129 = vunpack.c.l.b16 %v1113
      %v1130 = vunpack.c.l.b16 %v1114
      %v1131 = vpack.c.b16 %v1128, %v1127
      %v1132 = vpack.c.b16 %v1130, %v1129
      %v1136 = vsel %vm166, %v1122, 0
      %1138 = vmatprep.subr.bf16.mxu0 0
      %1139 = vmatpush1.bf16.msra.mxu0 %v1131
      %1140 = vmatprep.subr.bf16.mxu0 0
      %1141 = vmatpush1.bf16.msra.mxu0 %v1132
      %1142 = vmatprep.subr.bf16.mxu0 0
      %1143 = vmatpush1.bf16.msra.mxu0 0
      %1144 = vmatprep.subr.bf16.mxu0 0
      %1145 = vmatpush1.bf16.msra.mxu0 0
      %1146 = vmatprep.subr.bf16.mxu0 0
      %1147 = vmatpush1.bf16.msra.mxu0 0
      %1148 = vmatprep.subr.bf16.mxu0 0
      %1149 = vmatpush1.bf16.msra.mxu0 0
      %1150 = vmatprep.subr.bf16.mxu0 0
      %1151 = vmatpush1.bf16.msra.mxu0 0
      %1152 = vmatprep.subr.bf16.mxu0 0
      %1153 = vmatpush1.bf16.msra.mxu0 0
      %1154 = vmatprep.subr.bf16.mxu0 0
      %1155 = vmatpush1.bf16.msra.mxu0 0
      %1156 = vmatprep.subr.bf16.mxu0 0
      %1157 = vmatpush1.bf16.msra.mxu0 0
      %1158 = vmatprep.subr.bf16.mxu0 0
      %1159 = vmatpush1.bf16.msra.mxu0 0
      %1160 = vmatprep.subr.bf16.mxu0 0
      %1161 = vmatpush1.bf16.msra.mxu0 0
      %1162 = vmatprep.subr.bf16.mxu0 0
      %1163 = vmatpush1.bf16.msra.mxu0 0
      %1164 = vmatprep.subr.bf16.mxu0 0
      %1165 = vmatpush1.bf16.msra.mxu0 0
      %1166 = vmatprep.subr.bf16.mxu0 0
      %1167 = vmatpush1.bf16.msra.mxu0 0
      %1168 = vmatprep.subr.bf16.mxu0 0
      %1169 = vmatpush1.bf16.msra.mxu0 0
      %1170 = vmatprep.mubr.bf16.mxu0 0
      %1171 = vmatmul.mubr.bf16.gmra.mrb[0].mxu0 %v1136
      %v1172 = vpop.f32.mrb[0].mxu0
      %v1173 = vadd.f32 %v1120, %v1172
      %v1174 = vpop.f32.mrb[0].mxu0
      %v1175 = vpop.f32.mrb[0].mxu0
      %v1176 = vpop.f32.mrb[0].mxu0
      %1177 = vdwg.mxu0
      %vm1178 = vcmask 58368
      %1179 = vst.msk [vmem:[#allocation10] sm:$0x3] %vm1178, %v1173
    $region57: #{tpu_custom_call.1} parent=1 // pred_fallthru
      _
    // Predicated region
    $region58: #{tpu_custom_call.1} parent=1 // pred_check
      _
    $region59: #{tpu_custom_call.1} parent=1 // pred_check_branch
      %1181 = sbr.rel (0) target = $region61
    $region60: #{tpu_custom_call.1} parent=1 // pred_region
      %s1183 = ssub.s32 32, 32
      %1184 = vsyncadd [#allocation6], %s1183
      %s1186 = sshll.u32 [#allocation10], 4
      %s1187 = int_to_ptr.vmem [resolvable:$true] %s1186
      %1189 = dma.vmem_to_hbm [thread:$0]  %s1187, 32, %s9, [#allocation6]
    $region61: #{tpu_custom_call.1} parent=1 // pred_fallthru
      _
    // Predicated region
    $region62: #{tpu_custom_call.1} parent=1 // pred_check
      _
    $region63: #{tpu_custom_call.1} parent=1 // pred_check_branch
      %1191 = sbr.rel (0) target = $region65
    $region64: #{tpu_custom_call.1} parent=1 // pred_region
      %1192 = dma.done [#allocation6], 32
    $region65: #{tpu_custom_call.1} parent=1 // pred_fallthru
      _
    %1193 = vsyncpa [#allocation5], 1
    %1194 = vsyncpa [#allocation8], 1
    %1195 = vsyncpa [#allocation6], 1

</llo_original>
